<compile_context>
chip_gen: v6e
topology: v6e:2x2x1
jax: 0.10.0
libtpu: 0.0.40
codegen_flags: <defaults>
</compile_context>

<pallas_src>
import jax
import jax.numpy as jnp
import numpy as np
from jax.experimental import pallas as pl
from jax.experimental.pallas import tpu as pltpu

TEMPORAL_DIM = 512   # fixed by the module's hardcoded reshape(-1, 10, 512, 16)
FEATURE_DIM = 16
D_FF = 32
GROUP = 10
LN_EPS = 1e-5

LANES = 128                                      # TPU lane width
ROWS = TEMPORAL_DIM * FEATURE_DIM // LANES       # 64 packed rows per sample
PACK = LANES // FEATURE_DIM                      # 8 tokens packed per 128-lane row


def ate_layer_fw_kernel(x_ref, gamma_ref, beta_ref, w1_ref, b1_ref,
                        w2_ref, b2_ref, o_ref):
    # x_ref: (BN, ROWS, 128) — BN samples, each sample's (512, 16) activations packed
    # row-major into a lane-dense (64, 128) slab (8 tokens of 16 features per row).
    x = x_ref[...].astype(jnp.float32)
    bn, rows, lanes = x.shape
    inv_count = 1.0 / float(rows * lanes)

    # LayerNorm over the whole [T, F] slab of each sample (per-sample scalar stats).
    mean = jnp.sum(jnp.sum(x, axis=2, keepdims=True),
                   axis=1, keepdims=True) * inv_count           # (BN, 1, 1)
    xc = x - mean
    var = jnp.sum(jnp.sum(xc * xc, axis=2, keepdims=True),
                  axis=1, keepdims=True) * inv_count            # (BN, 1, 1)
    inv = jax.lax.rsqrt(var + LN_EPS)
    xn = xc * inv * gamma_ref[...] + beta_ref[...]              # (BN, ROWS, 128)

    # Feedforward on every token.  The 8 tokens packed in each 128-lane row are handled
    # with block-diagonal weights (kron(I8, W1) / kron(I8, W2)), keeping both matmuls
    # and the output store lane-dense.  Dropout layers are identity at inference.
    xn2 = xn.reshape(bn * rows, lanes)                          # tile-aligned, layout no-op
    h = jnp.dot(xn2, w1_ref[...], preferred_element_type=jnp.float32) + b1_ref[...]
    h = jnp.maximum(h, 0.0)                                     # (BN*ROWS, 8*d_ff)
    y = jnp.dot(h, w2_ref[...], preferred_element_type=jnp.float32) + b2_ref[...]
    o_ref[...] = y.reshape(bn, rows, lanes).astype(o_ref.dtype)


def _pick_block_n(n, max_bn):
    """Largest divisor of n that is <= max_bn (keeps grid exact, no padding pass)."""
    bn = max(1, min(max_bn, n))
    while n % bn != 0:
        bn -= 1
    return bn


def ate_layer_fw(x, gamma, beta, w1, b1, w2, b2, *, max_block_n=16):
    B, G, T, F = x.shape
    N = B * G
    dff = w1.shape[1]
    assert (T * F) % LANES == 0 and LANES % F == 0
    rows = T * F // LANES
    pack = LANES // F

    # Lane-dense packed views — free reshapes of the contiguous HBM buffers.
    x_p = x.reshape(N, rows, LANES)
    gamma_p = gamma.reshape(1, rows, LANES)
    beta_p = beta.reshape(1, rows, LANES)

    # Block-diagonal weights: 8 independent tokens per 128-lane row.
    eye = jnp.eye(pack, dtype=w1.dtype)
    w1_blk = jnp.kron(eye, w1)                                   # (128, pack*dff)
    w2_blk = jnp.kron(eye, w2)                                   # (pack*dff, 128)
    b1_blk = jnp.tile(b1.reshape(-1), pack).reshape(1, pack * dff)
    b2_blk = jnp.tile(b2.reshape(-1), pack).reshape(1, LANES)

    bn = _pick_block_n(N, max_block_n)
    grid = (N // bn,)

    itemsize = jnp.dtype(x.dtype).itemsize
    bytes_io = 2 * N * rows * LANES * itemsize
    bytes_par = 4 * int(w1_blk.size + w2_blk.size + b1_blk.size + b2_blk.size
                        + gamma_p.size + beta_p.size)
    cost = pl.CostEstimate(flops=int(4 * N * T * F * dff),
                           transcendentals=int(N),
                           bytes_accessed=int(bytes_io + bytes_par))

    out = pl.pallas_call(
        ate_layer_fw_kernel,
        out_shape=jax.ShapeDtypeStruct((N, rows, LANES), x.dtype),
        grid_spec=pltpu.PrefetchScalarGridSpec(
            num_scalar_prefetch=0,
            grid=grid,
            in_specs=[
                pl.BlockSpec((bn, rows, LANES), lambda i: (i, 0, 0)),   # x (packed)
                pl.BlockSpec((1, rows, LANES), lambda i: (0, 0, 0)),    # LN gamma (packed)
                pl.BlockSpec((1, rows, LANES), lambda i: (0, 0, 0)),    # LN beta (packed)
                pl.BlockSpec((LANES, pack * dff), lambda i: (0, 0)),    # kron(I, W1)
                pl.BlockSpec((1, pack * dff), lambda i: (0, 0)),        # tiled b1
                pl.BlockSpec((pack * dff, LANES), lambda i: (0, 0)),    # kron(I, W2)
                pl.BlockSpec((1, LANES), lambda i: (0, 0)),             # tiled b2
            ],
            out_specs=pl.BlockSpec((bn, rows, LANES), lambda i: (i, 0, 0)),
        ),
        compiler_params=pltpu.CompilerParams(
            dimension_semantics=("parallel",)),
        cost_estimate=cost,
    )(x_p, gamma_p, beta_p, w1_blk, b1_blk, w2_blk, b2_blk)

    # Module hardcodes the final reshape; all reshapes here are free views.
    return out.reshape(-1, GROUP, TEMPORAL_DIM, FEATURE_DIM)


def reference(x, gamma, beta, w1, b1, w2, b2):
    B, G, T, F = x.shape
    xf = x.reshape(B * G, T, F)
    mean = jnp.mean(xf, axis=(1, 2), keepdims=True)
    var = jnp.mean(jnp.square(xf - mean), axis=(1, 2), keepdims=True)
    xn = (xf - mean) / jnp.sqrt(var + LN_EPS) * gamma + beta
    h = jnp.maximum(jnp.einsum('ntf,fd->ntd', xn, w1) + b1[0], 0.0)
    y = jnp.einsum('ntd,df->ntf', h, w2) + b2[0]
    return y.reshape(-1, GROUP, TEMPORAL_DIM, FEATURE_DIM)


if __name__ == "__main__":
    key = jax.random.PRNGKey(0)
    k_x, k_g, k_be, k_w1, k_b1, k_w2, k_b2 = jax.random.split(key, 7)

    B = 2
    x = jax.random.normal(k_x, (B, GROUP, TEMPORAL_DIM, FEATURE_DIM), jnp.float32)

    # Deterministic parameter init (shapes match the PyTorch module):
    #   LayerNorm([512, 16]) affine params (perturbed from the ones/zeros default so the
    #   gamma/beta path is actually exercised);
    #   Linear(16, 32) / Linear(32, 16): stored as (in, out) so y = x @ W + b.
    gamma = 1.0 + 0.1 * jax.random.normal(k_g, (TEMPORAL_DIM, FEATURE_DIM), jnp.float32)
    beta = 0.1 * jax.random.normal(k_be, (TEMPORAL_DIM, FEATURE_DIM), jnp.float32)
    w1 = jax.random.uniform(k_w1, (FEATURE_DIM, D_FF), jnp.float32,
                            -1.0 / np.sqrt(FEATURE_DIM), 1.0 / np.sqrt(FEATURE_DIM))
    b1 = jax.random.uniform(k_b1, (1, D_FF), jnp.float32,
                            -1.0 / np.sqrt(FEATURE_DIM), 1.0 / np.sqrt(FEATURE_DIM))
    w2 = jax.random.uniform(k_w2, (D_FF, FEATURE_DIM), jnp.float32,
                            -1.0 / np.sqrt(D_FF), 1.0 / np.sqrt(D_FF))
    b2 = jax.random.uniform(k_b2, (1, FEATURE_DIM), jnp.float32,
                            -1.0 / np.sqrt(D_FF), 1.0 / np.sqrt(D_FF))

    out = jax.block_until_ready(ate_layer_fw(x, gamma, beta, w1, b1, w2, b2))
    ref = jax.block_until_ready(reference(x, gamma, beta, w1, b1, w2, b2))

    np.testing.assert_allclose(np.asarray(out), np.asarray(ref),
                               rtol=1e-5, atol=1e-5)
    assert out.shape == (B, GROUP, TEMPORAL_DIM, FEATURE_DIM)

    # TODO(synk): nn.Dropout train-mode RNG masking not implemented (identity at inference).
    print("KERNEL_OK")
</pallas_src>

<mosaic_0001>
module attributes {stable_mosaic.version = 11 : i64} {
  func.func @ate_layer_fw_kernel(%arg0: i32, %arg1: memref<10x64x128xf32, #tpu.memory_space<vmem>>, %arg2: memref<1x64x128xf32, #tpu.memory_space<vmem>>, %arg3: memref<1x64x128xf32, #tpu.memory_space<vmem>>, %arg4: memref<128x256xf32, #tpu.memory_space<vmem>>, %arg5: memref<1x256xf32, #tpu.memory_space<vmem>>, %arg6: memref<256x128xf32, #tpu.memory_space<vmem>>, %arg7: memref<1x128xf32, #tpu.memory_space<vmem>>, %arg8: memref<10x64x128xf32, #tpu.memory_space<vmem>>) attributes {dimension_semantics = [#tpu.dimension_semantics<parallel>], iteration_bounds = array<i64: 2>, scalar_prefetch = 0 : i64, scratch_operands = 0 : i64, tpu.core_type = #tpu.core_type<tc>, window_params = [{transform_indices = @transform_0, window_bounds = array<i64: 10, 64, 128>}, {pipeline_mode = #tpu.pipeline_mode<synchronous>, transform_indices = @transform_1, window_bounds = array<i64: 1, 64, 128>}, {pipeline_mode = #tpu.pipeline_mode<synchronous>, transform_indices = @transform_2, window_bounds = array<i64: 1, 64, 128>}, {pipeline_mode = #tpu.pipeline_mode<synchronous>, transform_indices = @transform_3, window_bounds = array<i64: 128, 256>}, {pipeline_mode = #tpu.pipeline_mode<synchronous>, transform_indices = @transform_4, window_bounds = array<i64: 1, 256>}, {pipeline_mode = #tpu.pipeline_mode<synchronous>, transform_indices = @transform_5, window_bounds = array<i64: 256, 128>}, {pipeline_mode = #tpu.pipeline_mode<synchronous>, transform_indices = @transform_6, window_bounds = array<i64: 1, 128>}, {transform_indices = @transform_7, window_bounds = array<i64: 10, 64, 128>}]} {
    %c0 = arith.constant 0 : index
    %c0_0 = arith.constant 0 : index
    %c0_1 = arith.constant 0 : index
    %0 = vector.load %arg1[%c0, %c0_0, %c0_1] : memref<10x64x128xf32, #tpu.memory_space<vmem>>, vector<10x64x128xf32>
    %cst = arith.constant dense<0.000000e+00> : vector<10x64xf32>
    %1 = vector.multi_reduction <add>, %0, %cst [2] : vector<10x64x128xf32> to vector<10x64xf32>
    %2 = vector.shape_cast %1 : vector<10x64xf32> to vector<10x64x1xf32>
    %cst_2 = arith.constant dense<0.000000e+00> : vector<10x1xf32>
    %3 = vector.multi_reduction <add>, %2, %cst_2 [1] : vector<10x64x1xf32> to vector<10x1xf32>
    %4 = vector.shape_cast %3 : vector<10x1xf32> to vector<10x1x1xf32>
    %cst_3 = arith.constant 1.22070313E-4 : f32
    %5 = vector.broadcast %cst_3 : f32 to vector<10x1x1xf32>
    %6 = arith.mulf %4, %5 : vector<10x1x1xf32>
    %7 = vector.broadcast %6 : vector<10x1x1xf32> to vector<10x64x128xf32>
    %8 = arith.subf %0, %7 : vector<10x64x128xf32>
    %9 = arith.mulf %8, %8 : vector<10x64x128xf32>
    %cst_4 = arith.constant dense<0.000000e+00> : vector<10x64xf32>
    %10 = vector.multi_reduction <add>, %9, %cst_4 [2] : vector<10x64x128xf32> to vector<10x64xf32>
    %11 = vector.shape_cast %10 : vector<10x64xf32> to vector<10x64x1xf32>
    %cst_5 = arith.constant dense<0.000000e+00> : vector<10x1xf32>
    %12 = vector.multi_reduction <add>, %11, %cst_5 [1] : vector<10x64x1xf32> to vector<10x1xf32>
    %13 = vector.shape_cast %12 : vector<10x1xf32> to vector<10x1x1xf32>
    %cst_6 = arith.constant 1.22070313E-4 : f32
    %14 = vector.broadcast %cst_6 : f32 to vector<10x1x1xf32>
    %15 = arith.mulf %13, %14 : vector<10x1x1xf32>
    %cst_7 = arith.constant 9.99999974E-6 : f32
    %16 = vector.broadcast %cst_7 : f32 to vector<10x1x1xf32>
    %17 = arith.addf %15, %16 : vector<10x1x1xf32>
    %18 = math.rsqrt %17 : vector<10x1x1xf32>
    %19 = vector.broadcast %18 : vector<10x1x1xf32> to vector<10x64x128xf32>
    %20 = arith.mulf %8, %19 : vector<10x64x128xf32>
    %c0_8 = arith.constant 0 : index
    %c0_9 = arith.constant 0 : index
    %c0_10 = arith.constant 0 : index
    %21 = vector.load %arg2[%c0_8, %c0_9, %c0_10] : memref<1x64x128xf32, #tpu.memory_space<vmem>>, vector<1x64x128xf32>
    %22 = vector.broadcast %21 : vector<1x64x128xf32> to vector<10x64x128xf32>
    %23 = arith.mulf %20, %22 : vector<10x64x128xf32>
    %c0_11 = arith.constant 0 : index
    %c0_12 = arith.constant 0 : index
    %c0_13 = arith.constant 0 : index
    %24 = vector.load %arg3[%c0_11, %c0_12, %c0_13] : memref<1x64x128xf32, #tpu.memory_space<vmem>>, vector<1x64x128xf32>
    %25 = vector.broadcast %24 : vector<1x64x128xf32> to vector<10x64x128xf32>
    %26 = arith.addf %23, %25 : vector<10x64x128xf32>
    %27 = vector.shape_cast %26 : vector<10x64x128xf32> to vector<640x128xf32>
    %c0_14 = arith.constant 0 : index
    %c0_15 = arith.constant 0 : index
    %28 = vector.load %arg4[%c0_14, %c0_15] : memref<128x256xf32, #tpu.memory_space<vmem>>, vector<128x256xf32>
    %cst_16 = arith.constant dense<0.000000e+00> : vector<640x256xf32>
    %29 = tpu.matmul %27, %28, %cst_16 {dimension_numbers = #tpu.dot_dimension_numbers<[1], [0], [0], [1], [0, 0, 1, 1], [], []>} : vector<640x128xf32>, vector<128x256xf32>, vector<640x256xf32> -> vector<640x256xf32>
    %c0_17 = arith.constant 0 : index
    %c0_18 = arith.constant 0 : index
    %30 = vector.load %arg5[%c0_17, %c0_18] : memref<1x256xf32, #tpu.memory_space<vmem>>, vector<1x256xf32>
    %31 = vector.broadcast %30 : vector<1x256xf32> to vector<640x256xf32>
    %32 = arith.addf %29, %31 : vector<640x256xf32>
    %cst_19 = arith.constant 0.000000e+00 : f32
    %33 = vector.broadcast %cst_19 : f32 to vector<640x256xf32>
    %34 = arith.maximumf %32, %33 : vector<640x256xf32>
    %c0_20 = arith.constant 0 : index
    %c0_21 = arith.constant 0 : index
    %35 = vector.load %arg6[%c0_20, %c0_21] : memref<256x128xf32, #tpu.memory_space<vmem>>, vector<256x128xf32>
    %cst_22 = arith.constant dense<0.000000e+00> : vector<640x128xf32>
    %36 = tpu.matmul %34, %35, %cst_22 {dimension_numbers = #tpu.dot_dimension_numbers<[1], [0], [0], [1], [0, 0, 1, 1], [], []>} : vector<640x256xf32>, vector<256x128xf32>, vector<640x128xf32> -> vector<640x128xf32>
    %c0_23 = arith.constant 0 : index
    %c0_24 = arith.constant 0 : index
    %37 = vector.load %arg7[%c0_23, %c0_24] : memref<1x128xf32, #tpu.memory_space<vmem>>, vector<1x128xf32>
    %38 = vector.broadcast %37 : vector<1x128xf32> to vector<640x128xf32>
    %39 = arith.addf %36, %38 : vector<640x128xf32>
    %40 = vector.shape_cast %39 : vector<640x128xf32> to vector<10x64x128xf32>
    %c0_25 = arith.constant 0 : index
    %c0_26 = arith.constant 0 : index
    %c0_27 = arith.constant 0 : index
    %41 = vector.load %arg8[%c0_25, %c0_26, %c0_27] : memref<10x64x128xf32, #tpu.memory_space<vmem>>, vector<10x64x128xf32>
    tpu.vector_store %arg8[%c0_25, %c0_26, %c0_27], %40 {strides = array<i32>} : memref<10x64x128xf32, #tpu.memory_space<vmem>>, vector<10x64x128xf32>,
    return
  }
  func.func @transform_0(%arg0: i32) -> (i32, i32, i32) {
    %c0_i32 = arith.constant 0 : i32
    %c0_i32_0 = arith.constant 0 : i32
    %c0_i32_1 = arith.constant 0 : i32
    return %arg0, %c0_i32, %c0_i32_0 : i32, i32, i32
  }
  func.func @transform_1(%arg0: i32) -> (i32, i32, i32) {
    %c0_i32 = arith.constant 0 : i32
    %c0_i32_0 = arith.constant 0 : i32
    %c0_i32_1 = arith.constant 0 : i32
    %c0_i32_2 = arith.constant 0 : i32
    return %c0_i32, %c0_i32_0, %c0_i32_1 : i32, i32, i32
  }
  func.func @transform_2(%arg0: i32) -> (i32, i32, i32) {
    %c0_i32 = arith.constant 0 : i32
    %c0_i32_0 = arith.constant 0 : i32
    %c0_i32_1 = arith.constant 0 : i32
    %c0_i32_2 = arith.constant 0 : i32
    return %c0_i32, %c0_i32_0, %c0_i32_1 : i32, i32, i32
  }
  func.func @transform_3(%arg0: i32) -> (i32, i32) {
    %c0_i32 = arith.constant 0 : i32
    %c0_i32_0 = arith.constant 0 : i32
    %c0_i32_1 = arith.constant 0 : i32
    return %c0_i32, %c0_i32_0 : i32, i32
  }
  func.func @transform_4(%arg0: i32) -> (i32, i32) {
    %c0_i32 = arith.constant 0 : i32
    %c0_i32_0 = arith.constant 0 : i32
    %c0_i32_1 = arith.constant 0 : i32
    return %c0_i32, %c0_i32_0 : i32, i32
  }
  func.func @transform_5(%arg0: i32) -> (i32, i32) {
    %c0_i32 = arith.constant 0 : i32
    %c0_i32_0 = arith.constant 0 : i32
    %c0_i32_1 = arith.constant 0 : i32
    return %c0_i32, %c0_i32_0 : i32, i32
  }
  func.func @transform_6(%arg0: i32) -> (i32, i32) {
    %c0_i32 = arith.constant 0 : i32
    %c0_i32_0 = arith.constant 0 : i32
    %c0_i32_1 = arith.constant 0 : i32
    return %c0_i32, %c0_i32_0 : i32, i32
  }
  func.func @transform_7(%arg0: i32) -> (i32, i32, i32) {
    %c0_i32 = arith.constant 0 : i32
    %c0_i32_0 = arith.constant 0 : i32
    %c0_i32_1 = arith.constant 0 : i32
    return %arg0, %c0_i32, %c0_i32_0 : i32, i32, i32
  }
}

</mosaic_0001>

<llo_original>
// kernel: tpu_custom_call.1
$region0: #{tpu_custom_call.1}
  #allocation0 [shape = 'u32[]', space=smem, size = 0x4, offset = 0x4, fixed_abs, tag = 'smem constant byte address 0x4 - core index']
  #allocation1 [shape = 'u32[144,128]{1,0:T(1,128)}', space=vmem, size = 0x12000, scoped, tag = 'internal scratch']
  %s0 = inlined_call_operand.hbm [shape: f32[20,64,128], index: 0, kind: input, shape index: {}]
  %s1 = inlined_call_operand.hbm [shape: f32[1,64,128], index: 1, kind: input, shape index: {}]
  %s2 = inlined_call_operand.hbm [shape: f32[1,64,128], index: 2, kind: input, shape index: {}]
  %s3 = inlined_call_operand.hbm [shape: f32[128,256], index: 3, kind: input, shape index: {}]
  %s4 = inlined_call_operand.vmem [shape: f32[1,256], index: 4, kind: input, shape index: {}]
  %s5 = inlined_call_operand.hbm [shape: f32[256,128], index: 5, kind: input, shape index: {}]
  %s6 = inlined_call_operand.vmem [shape: f32[1,128], index: 6, kind: input, shape index: {}]
  %s7 = inlined_call_operand.hbm [shape: f32[20,64,128], index: 7, kind: output, shape index: {}]
  %s8 = sld [smem:[#allocation0]]
  $region81: #{tpu_custom_call.1} parent=0
    _
  %s10 = ssub.s32 1, %s8
  %s11 = scalar_select 0, %s10, %s8
  $region1: #{tpu_custom_call.1} parent=0
    #allocation2 [shape = 'u8[655360]{0}', space=vmem, size = 0xa0000, scoped, tag = 'input window, operand 0']
    #allocation3 [shape = 's32[2]{0}', space=sflag, size = 0x8, scoped, tag = 'scoped memory for tpu_custom_call.1']
    #allocation4 [shape = 's32[2]{0}', space=sflag, size = 0x8, scoped, tag = 'scoped memory for tpu_custom_call.1']
    #allocation5 [shape = 'u8[32768]{0}', space=vmem, size = 0x8000, scoped, tag = 'input window, operand 1, single buffered']
    #allocation6 [shape = 's32[1]{0}', space=sflag, size = 0x4, scoped, tag = 'scoped memory for tpu_custom_call.1']
    #allocation7 [shape = 'u8[32768]{0}', space=vmem, size = 0x8000, scoped, tag = 'input window, operand 2, single buffered']
    #allocation8 [shape = 'u8[131072]{0}', space=vmem, size = 0x20000, scoped, tag = 'input window, operand 3, single buffered']
    #allocation9 [shape = 's32[1]{0}', space=sflag, size = 0x4, scoped, tag = 'scoped memory for tpu_custom_call.1']
    #allocation10 [shape = 'u8[131072]{0}', space=vmem, size = 0x20000, scoped, tag = 'input window, operand 5, single buffered']
    #allocation11 [shape = 'u8[655360]{0}', space=vmem, size = 0xa0000, scoped, tag = 'output window, operand 0']
    %12 = vsyncpa [#allocation3], 0
    %s13 = scalar_lea.sflag [#allocation3], 1
    %14 = vsyncpa %s13, 0
    %15 = vsyncpa [#allocation6], 0
    %16 = vsyncpa [#allocation9], 0
    %17 = vsyncpa [#allocation4], 0
    %s18 = scalar_lea.sflag [#allocation4], 1
    %19 = vsyncpa %s18, 0
    loop: start=0, step=1, limit=4
    $region2: #{tpu_custom_call.1} parent=1 // loop_pre_header
      _
    $region3: #{tpu_custom_call.1} parent=1 // loop_header
      %s21 = sphi 0, %s25
      %p22 = scmp.ge.s32.totalorder %s21, 4
      %s31 = sphi 0, %s33
      %s34 = sphi 0, %s31
      %s35 = sphi 0, %s34
      %s51 = sphi 0, %s35
      %s55 = sphi 0, %s55
      %s57 = sphi 0, %s55
      %s58 = sphi 0, %s57
      %s72 = sphi 0, %s58
      %s76 = sphi 0, %s76
      %s78 = sphi 0, %s76
      %s79 = sphi 0, %s78
      %s93 = sphi 0, %s79
      %s97 = sphi 0, %s97
      %s99 = sphi 0, %s97
      %s100 = sphi 0, %s99
      %s114 = sphi 0, %s100
      %s118 = sphi 0, %s118
      %s120 = sphi 0, %s118
      %s121 = sphi 0, %s120
      %s135 = sphi 0, %s121
      %s139 = sphi 0, %s139
      %s141 = sphi 0, %s139
      %s142 = sphi 0, %s141
      %s156 = sphi 0, %s142
      %s160 = sphi 0, %s160
      %s162 = sphi 0, %s160
      %s163 = sphi 0, %s162
      %s177 = sphi 0, %s163
      %s183 = sphi 0, %s185
      %s186 = sphi 0, %s183
      %s187 = sphi 0, %s186
      %s203 = sphi 0, %s187
    $region4: #{tpu_custom_call.1} parent=1 // loop_header_branch
      %24 = sbr.rel (%p22) target = $region8
    $region5: #{tpu_custom_call.1} parent=1 // loop_body
      %s26 = ssub.s32 %s21, 1
      %s27 = ssub.s32 %s21, 2
      %s28 = sadd.s32 %s21, 1
      %s29 = ssub.s32 %s21, %s28
      %p30 = scmp.eq.s32.totalorder %s29, 0
      %s32 = sadd.s32 %s31, 1
      %s33 = scalar_select %p30, %s31, %s32
      %p36 = pneg %p30
      %p37 = scmp.eq.s32.totalorder %s21, 1
      %p38 = por %p36, %p37
      %p39 = scmp.ne.s32.totalorder %s31, %s34
      %p40 = scmp.eq.s32.totalorder %s21, 0
      %p41 = por %p39, %p40
      %p42 = scmp.ne.s32.totalorder %s31, %s34
      %p43 = scmp.eq.s32.totalorder %s26, 1
      %p44 = por %p42, %p43
      %p45 = scmp.ne.s32.totalorder %s34, %s35
      %p46 = scmp.eq.s32.totalorder %s26, 0
      %p47 = por %p45, %p46
      %p48 = scmp.ne.s32.totalorder %s34, %s35
      %p49 = scmp.eq.s32.totalorder %s27, 1
      %p50 = por %p48, %p49
      %p52 = scmp.ne.s32.totalorder %s35, %s51
      %p53 = scmp.eq.s32.totalorder %s27, 0
      %p54 = por %p52, %p53
      %s56 = sadd.s32 %s55, 1
      %p59 = scmp.eq.s32.totalorder %s21, 1
      %p60 = scmp.ne.s32.totalorder %s55, %s57
      %p61 = scmp.eq.s32.totalorder %s21, 0
      %p62 = por %p60, %p61
      %p63 = scmp.ne.s32.totalorder %s55, %s57
      %p64 = scmp.eq.s32.totalorder %s26, 1
      %p65 = por %p63, %p64
      %p66 = scmp.ne.s32.totalorder %s57, %s58
      %p67 = scmp.eq.s32.totalorder %s26, 0
      %p68 = por %p66, %p67
      %p69 = scmp.ne.s32.totalorder %s57, %s58
      %p70 = scmp.eq.s32.totalorder %s27, 1
      %p71 = por %p69, %p70
      %p73 = scmp.ne.s32.totalorder %s58, %s72
      %p74 = scmp.eq.s32.totalorder %s27, 0
      %p75 = por %p73, %p74
      %s77 = sadd.s32 %s76, 1
      %p80 = scmp.eq.s32.totalorder %s21, 1
      %p81 = scmp.ne.s32.totalorder %s76, %s78
      %p82 = scmp.eq.s32.totalorder %s21, 0
      %p83 = por %p81, %p82
      %p84 = scmp.ne.s32.totalorder %s76, %s78
      %p85 = scmp.eq.s32.totalorder %s26, 1
      %p86 = por %p84, %p85
      %p87 = scmp.ne.s32.totalorder %s78, %s79
      %p88 = scmp.eq.s32.totalorder %s26, 0
      %p89 = por %p87, %p88
      %p90 = scmp.ne.s32.totalorder %s78, %s79
      %p91 = scmp.eq.s32.totalorder %s27, 1
      %p92 = por %p90, %p91
      %p94 = scmp.ne.s32.totalorder %s79, %s93
      %p95 = scmp.eq.s32.totalorder %s27, 0
      %p96 = por %p94, %p95
      %s98 = sadd.s32 %s97, 1
      %p101 = scmp.eq.s32.totalorder %s21, 1
      %p102 = scmp.ne.s32.totalorder %s97, %s99
      %p103 = scmp.eq.s32.totalorder %s21, 0
      %p104 = por %p102, %p103
      %p105 = scmp.ne.s32.totalorder %s97, %s99
      %p106 = scmp.eq.s32.totalorder %s26, 1
      %p107 = por %p105, %p106
      %p108 = scmp.ne.s32.totalorder %s99, %s100
      %p109 = scmp.eq.s32.totalorder %s26, 0
      %p110 = por %p108, %p109
      %p111 = scmp.ne.s32.totalorder %s99, %s100
      %p112 = scmp.eq.s32.totalorder %s27, 1
      %p113 = por %p111, %p112
      %p115 = scmp.ne.s32.totalorder %s100, %s114
      %p116 = scmp.eq.s32.totalorder %s27, 0
      %p117 = por %p115, %p116
      %s119 = sadd.s32 %s118, 1
      %p122 = scmp.eq.s32.totalorder %s21, 1
      %p123 = scmp.ne.s32.totalorder %s118, %s120
      %p124 = scmp.eq.s32.totalorder %s21, 0
      %p125 = por %p123, %p124
      %p126 = scmp.ne.s32.totalorder %s118, %s120
      %p127 = scmp.eq.s32.totalorder %s26, 1
      %p128 = por %p126, %p127
      %p129 = scmp.ne.s32.totalorder %s120, %s121
      %p130 = scmp.eq.s32.totalorder %s26, 0
      %p131 = por %p129, %p130
      %p132 = scmp.ne.s32.totalorder %s120, %s121
      %p133 = scmp.eq.s32.totalorder %s27, 1
      %p134 = por %p132, %p133
      %p136 = scmp.ne.s32.totalorder %s121, %s135
      %p137 = scmp.eq.s32.totalorder %s27, 0
      %p138 = por %p136, %p137
      %s140 = sadd.s32 %s139, 1
      %p143 = scmp.eq.s32.totalorder %s21, 1
      %p144 = scmp.ne.s32.totalorder %s139, %s141
      %p145 = scmp.eq.s32.totalorder %s21, 0
      %p146 = por %p144, %p145
      %p147 = scmp.ne.s32.totalorder %s139, %s141
      %p148 = scmp.eq.s32.totalorder %s26, 1
      %p149 = por %p147, %p148
      %p150 = scmp.ne.s32.totalorder %s141, %s142
      %p151 = scmp.eq.s32.totalorder %s26, 0
      %p152 = por %p150, %p151
      %p153 = scmp.ne.s32.totalorder %s141, %s142
      %p154 = scmp.eq.s32.totalorder %s27, 1
      %p155 = por %p153, %p154
      %p157 = scmp.ne.s32.totalorder %s142, %s156
      %p158 = scmp.eq.s32.totalorder %s27, 0
      %p159 = por %p157, %p158
      %s161 = sadd.s32 %s160, 1
      %p164 = scmp.eq.s32.totalorder %s21, 1
      %p165 = scmp.ne.s32.totalorder %s160, %s162
      %p166 = scmp.eq.s32.totalorder %s21, 0
      %p167 = por %p165, %p166
      %p168 = scmp.ne.s32.totalorder %s160, %s162
      %p169 = scmp.eq.s32.totalorder %s26, 1
      %p170 = por %p168, %p169
      %p171 = scmp.ne.s32.totalorder %s162, %s163
      %p172 = scmp.eq.s32.totalorder %s26, 0
      %p173 = por %p171, %p172
      %p174 = scmp.ne.s32.totalorder %s162, %s163
      %p175 = scmp.eq.s32.totalorder %s27, 1
      %p176 = por %p174, %p175
      %p178 = scmp.ne.s32.totalorder %s163, %s177
      %p179 = scmp.eq.s32.totalorder %s27, 0
      %p180 = por %p178, %p179
      %s181 = ssub.s32 %s21, %s28
      %p182 = scmp.eq.s32.totalorder %s181, 0
      %s184 = sadd.s32 %s183, 1
      %s185 = scalar_select %p182, %s183, %s184
      %p188 = pneg %p182
      %p189 = scmp.eq.s32.totalorder %s21, 1
      %p190 = por %p188, %p189
      %p191 = scmp.ne.s32.totalorder %s183, %s186
      %p192 = scmp.eq.s32.totalorder %s21, 0
      %p193 = por %p191, %p192
      %p194 = scmp.ne.s32.totalorder %s183, %s186
      %p195 = scmp.eq.s32.totalorder %s26, 1
      %p196 = por %p194, %p195
      %p197 = scmp.ne.s32.totalorder %s186, %s187
      %p198 = scmp.eq.s32.totalorder %s26, 0
      %p199 = por %p197, %p198
      %p200 = scmp.ne.s32.totalorder %s186, %s187
      %p201 = scmp.eq.s32.totalorder %s27, 1
      %p202 = por %p200, %p201
      %p204 = scmp.ne.s32.totalorder %s187, %s203
      %p205 = scmp.eq.s32.totalorder %s27, 0
      %p206 = por %p204, %p205
      %p207 = scmp.le.s32.totalorder 1, %s21
      %p208 = scmp.lt.s32.totalorder %s21, 3
      %p209 = pnand %p207, %p208
      %p210 = pneg %p209
      // Predicated region
      $region9: #{tpu_custom_call.1} parent=5 // pred_check
        _
      $region10: #{tpu_custom_call.1} parent=5 // pred_check_branch
        %212 = sbr.rel (%p209) target = $region12
      $region11: #{tpu_custom_call.1} parent=5 // pred_region
        %s213 = ssub.s32 %s21, 1
        // Predicated region
        $region13: #{tpu_custom_call.1} parent=11 // pred_check
          %p214 = pneg %p68
        $region14: #{tpu_custom_call.1} parent=11 // pred_check_branch
          %216 = sbr.rel (%p214) target = $region16
        $region15: #{tpu_custom_call.1} parent=11 // pred_region
          %s218 = ssub.s32 1024, 1024
          %219 = vsyncadd [#allocation6], %s218
          %s220 = sshll.u32 [#allocation5], 4
          %s221 = int_to_ptr.vmem [resolvable:$true] %s220
          %226 = dma.hbm_to_vmem [thread:$0]  %s1, 1024, %s221, [#allocation6], 128, 128, 8
        $region16: #{tpu_custom_call.1} parent=11 // pred_fallthru
          _
        // Predicated region
        $region17: #{tpu_custom_call.1} parent=11 // pred_check
          %p227 = pneg %p89
        $region18: #{tpu_custom_call.1} parent=11 // pred_check_branch
          %229 = sbr.rel (%p227) target = $region20
        $region19: #{tpu_custom_call.1} parent=11 // pred_region
          %s231 = ssub.s32 1024, 1024
          %232 = vsyncadd [#allocation6], %s231
          %s233 = sshll.u32 [#allocation7], 4
          %s234 = int_to_ptr.vmem [resolvable:$true] %s233
          %239 = dma.hbm_to_vmem [thread:$0]  %s2, 1024, %s234, [#allocation6], 128, 128, 8
        $region20: #{tpu_custom_call.1} parent=11 // pred_fallthru
          _
        // Predicated region
        $region21: #{tpu_custom_call.1} parent=11 // pred_check
          %p240 = pneg %p110
        $region22: #{tpu_custom_call.1} parent=11 // pred_check_branch
          %242 = sbr.rel (%p240) target = $region24
        $region23: #{tpu_custom_call.1} parent=11 // pred_region
          %s244 = ssub.s32 4096, 4096
          %245 = vsyncadd [#allocation9], %s244
          %s246 = sshll.u32 [#allocation8], 4
          %s247 = int_to_ptr.vmem [resolvable:$true] %s246
          %252 = dma.hbm_to_vmem [thread:$0]  %s3, 4096, %s247, [#allocation9], 256, 256, 16
        $region24: #{tpu_custom_call.1} parent=11 // pred_fallthru
          _
        // Predicated region
        $region25: #{tpu_custom_call.1} parent=11 // pred_check
          %p253 = pneg %p131
        $region26: #{tpu_custom_call.1} parent=11 // pred_check_branch
          %255 = sbr.rel (%p253) target = $region28
        $region27: #{tpu_custom_call.1} parent=11 // pred_region
          _
        $region28: #{tpu_custom_call.1} parent=11 // pred_fallthru
          _
        // Predicated region
        $region29: #{tpu_custom_call.1} parent=11 // pred_check
          %p256 = pneg %p152
        $region30: #{tpu_custom_call.1} parent=11 // pred_check_branch
          %258 = sbr.rel (%p256) target = $region32
        $region31: #{tpu_custom_call.1} parent=11 // pred_region
          %s260 = ssub.s32 4096, 4096
          %261 = vsyncadd [#allocation9], %s260
          %s262 = sshll.u32 [#allocation10], 4
          %s263 = int_to_ptr.vmem [resolvable:$true] %s262
          %268 = dma.hbm_to_vmem [thread:$0]  %s5, 4096, %s263, [#allocation9], 128, 128, 8
        $region32: #{tpu_custom_call.1} parent=11 // pred_fallthru
          _
        // Predicated region
        $region33: #{tpu_custom_call.1} parent=11 // pred_check
          %p269 = pneg %p173
        $region34: #{tpu_custom_call.1} parent=11 // pred_check_branch
          %271 = sbr.rel (%p269) target = $region36
        $region35: #{tpu_custom_call.1} parent=11 // pred_region
          _
        $region36: #{tpu_custom_call.1} parent=11 // pred_fallthru
          _
      $region12: #{tpu_custom_call.1} parent=5 // pred_fallthru
        _
      %p272 = scmp.lt.s32.totalorder %s21, 2
      // Predicated region
      $region37: #{tpu_custom_call.1} parent=5 // pred_check
        %p273 = pneg %p272
      $region38: #{tpu_custom_call.1} parent=5 // pred_check_branch
        %275 = sbr.rel (%p273) target = $region40
      $region39: #{tpu_custom_call.1} parent=5 // pred_region
        // Predicated region
        $region41: #{tpu_custom_call.1} parent=39 // pred_check
          %p276 = pneg %p41
        $region42: #{tpu_custom_call.1} parent=39 // pred_check_branch
          %278 = sbr.rel (%p276) target = $region44
        $region43: #{tpu_custom_call.1} parent=39 // pred_region
          %s279 = sand.u32 %s31, 1
          %s280 = scalar_lea.sflag [#allocation3], %s279
          %s281 = sand.u32 %s31, 1
          %s282 = smul.addr %s281, 640
          %s283 = scalar_lea.vmem [#allocation2], %s282
          %s284 = smul.u32 10, %s21
          %s286 = ssub.s32 10240, 10240
          %287 = vsyncadd %s280, %s286
          %s288 = smul.addr %s284, 8
          %s289 = smul.addr %s288, 128
          %s290 = scalar_lea.hbm %s0, %s289
          %s291 = sshll.u32 %s283, 4
          %s292 = int_to_ptr.vmem [resolvable:$true] %s291
          %297 = dma.hbm_to_vmem [thread:$0]  %s290, 10240, %s292, %s280, 128, 128, 8
        $region44: #{tpu_custom_call.1} parent=39 // pred_fallthru
          _
      $region40: #{tpu_custom_call.1} parent=5 // pred_fallthru
        _
      %p298 = scmp.le.s32.totalorder 1, %s21
      %p299 = scmp.lt.s32.totalorder %s21, 3
      %p300 = pnand %p298, %p299
      %p301 = pneg %p300
      // Predicated region
      $region45: #{tpu_custom_call.1} parent=5 // pred_check
        _
      $region46: #{tpu_custom_call.1} parent=5 // pred_check_branch
        %303 = sbr.rel (%p300) target = $region48
      $region47: #{tpu_custom_call.1} parent=5 // pred_region
        %s304 = ssub.s32 %s21, 1
        %s305 = sand.u32 %s34, 1
        %s306 = scalar_lea.sflag [#allocation3], %s305
        %s307 = sand.u32 %s34, 1
        %s308 = smul.addr %s307, 640
        %s309 = scalar_lea.vmem [#allocation2], %s308
        // Predicated region
        $region49: #{tpu_custom_call.1} parent=47 // pred_check
          %p310 = pneg %p47
        $region50: #{tpu_custom_call.1} parent=47 // pred_check_branch
          %312 = sbr.rel (%p310) target = $region52
        $region51: #{tpu_custom_call.1} parent=47 // pred_region
          %313 = dma.done %s306, 10240
        $region52: #{tpu_custom_call.1} parent=47 // pred_fallthru
          _
        // Predicated region
        $region53: #{tpu_custom_call.1} parent=47 // pred_check
          %p314 = pneg %p68
        $region54: #{tpu_custom_call.1} parent=47 // pred_check_branch
          %316 = sbr.rel (%p314) target = $region56
        $region55: #{tpu_custom_call.1} parent=47 // pred_region
          %317 = dma.done [#allocation6], 1024
        $region56: #{tpu_custom_call.1} parent=47 // pred_fallthru
          _
        // Predicated region
        $region57: #{tpu_custom_call.1} parent=47 // pred_check
          %p318 = pneg %p89
        $region58: #{tpu_custom_call.1} parent=47 // pred_check_branch
          %320 = sbr.rel (%p318) target = $region60
        $region59: #{tpu_custom_call.1} parent=47 // pred_region
          %321 = dma.done [#allocation6], 1024
        $region60: #{tpu_custom_call.1} parent=47 // pred_fallthru
          _
        // Predicated region
        $region61: #{tpu_custom_call.1} parent=47 // pred_check
          %p322 = pneg %p110
        $region62: #{tpu_custom_call.1} parent=47 // pred_check_branch
          %324 = sbr.rel (%p322) target = $region64
        $region63: #{tpu_custom_call.1} parent=47 // pred_region
          %325 = dma.done [#allocation9], 4096
        $region64: #{tpu_custom_call.1} parent=47 // pred_fallthru
          _
        // Predicated region
        $region65: #{tpu_custom_call.1} parent=47 // pred_check
          %p326 = pneg %p152
        $region66: #{tpu_custom_call.1} parent=47 // pred_check_branch
          %328 = sbr.rel (%p326) target = $region68
        $region67: #{tpu_custom_call.1} parent=47 // pred_region
          %329 = dma.done [#allocation9], 4096
        $region68: #{tpu_custom_call.1} parent=47 // pred_fallthru
          _
        %s330 = sand.u32 %s34, 1
        %s331 = scalar_lea.sflag [#allocation3], %s330
        %s332 = sand.u32 %s34, 1
        %s333 = smul.addr %s332, 640
        %s334 = scalar_lea.vmem [#allocation2], %s333
        %p335 = pneg %p47
        %p336 = pneg %p44
        %p337 = pneg %p68
        %p338 = pneg %p65
        %p339 = pneg %p89
        %p340 = pneg %p86
        %p341 = pneg %p110
        %p342 = pneg %p107
        %p343 = pneg %p131
        %p344 = pneg %p128
        %p345 = pneg %p152
        %p346 = pneg %p149
        %p347 = pneg %p173
        %p348 = pneg %p170
        %p349 = pneg %p199
        %p350 = pneg %p196
        %s351 = sand.u32 %s186, 1
        %s352 = scalar_lea.sflag [#allocation4], %s351
        %s353 = sand.u32 %s186, 1
        %s354 = smul.addr %s353, 640
        %s355 = scalar_lea.vmem [#allocation11], %s354
        %s356 = smul.u32 10, %s26
        %s357 = smul.u32 10, %s26
        %v358 = vld [vmem:[%s309] sm:$0xff]
        %v359 = vld [vmem:[%s309 + $0x8] sm:$0xff]
        %v360 = vld [vmem:[%s309 + $0x10] sm:$0xff]
        %v361 = vld [vmem:[%s309 + $0x18] sm:$0xff]
        %v362 = vld [vmem:[%s309 + $0x20] sm:$0xff]
        %v363 = vld [vmem:[%s309 + $0x28] sm:$0xff]
        %v364 = vld [vmem:[%s309 + $0x30] sm:$0xff]
        %v365 = vld [vmem:[%s309 + $0x38] sm:$0xff]
        %v366 = vld [vmem:[%s309 + $0x40] sm:$0xff]
        %v367 = vld [vmem:[%s309 + $0x48] sm:$0xff]
        %v368 = vld [vmem:[%s309 + $0x50] sm:$0xff]
        %v369 = vld [vmem:[%s309 + $0x58] sm:$0xff]
        %v370 = vld [vmem:[%s309 + $0x60] sm:$0xff]
        %v371 = vld [vmem:[%s309 + $0x68] sm:$0xff]
        %v372 = vld [vmem:[%s309 + $0x70] sm:$0xff]
        %v373 = vld [vmem:[%s309 + $0x78] sm:$0xff]
        %v374 = vld [vmem:[%s309 + $0x80] sm:$0xff]
        %v375 = vld [vmem:[%s309 + $0x88] sm:$0xff]
        %v376 = vld [vmem:[%s309 + $0x90] sm:$0xff]
        %v377 = vld [vmem:[%s309 + $0x98] sm:$0xff]
        %v378 = vld [vmem:[%s309 + $0xa0] sm:$0xff]
        %v379 = vld [vmem:[%s309 + $0xa8] sm:$0xff]
        %v380 = vld [vmem:[%s309 + $0xb0] sm:$0xff]
        %v381 = vld [vmem:[%s309 + $0xb8] sm:$0xff]
        %v382 = vld [vmem:[%s309 + $0xc0] sm:$0xff]
        %v383 = vld [vmem:[%s309 + $0xc8] sm:$0xff]
        %v384 = vld [vmem:[%s309 + $0xd0] sm:$0xff]
        %v385 = vld [vmem:[%s309 + $0xd8] sm:$0xff]
        %v386 = vld [vmem:[%s309 + $0xe0] sm:$0xff]
        %v387 = vld [vmem:[%s309 + $0xe8] sm:$0xff]
        %v388 = vld [vmem:[%s309 + $0xf0] sm:$0xff]
        %v389 = vld [vmem:[%s309 + $0xf8] sm:$0xff]
        %v390 = vld [vmem:[%s309 + $0x100] sm:$0xff]
        %v391 = vld [vmem:[%s309 + $0x108] sm:$0xff]
        %v392 = vld [vmem:[%s309 + $0x110] sm:$0xff]
        %v393 = vld [vmem:[%s309 + $0x118] sm:$0xff]
        %v394 = vld [vmem:[%s309 + $0x120] sm:$0xff]
        %v395 = vld [vmem:[%s309 + $0x128] sm:$0xff]
        %v396 = vld [vmem:[%s309 + $0x130] sm:$0xff]
        %v397 = vld [vmem:[%s309 + $0x138] sm:$0xff]
        %v398 = vld [vmem:[%s309 + $0x140] sm:$0xff]
        %v399 = vld [vmem:[%s309 + $0x148] sm:$0xff]
        %v400 = vld [vmem:[%s309 + $0x150] sm:$0xff]
        %v401 = vld [vmem:[%s309 + $0x158] sm:$0xff]
        %v402 = vld [vmem:[%s309 + $0x160] sm:$0xff]
        %v403 = vld [vmem:[%s309 + $0x168] sm:$0xff]
        %v404 = vld [vmem:[%s309 + $0x170] sm:$0xff]
        %v405 = vld [vmem:[%s309 + $0x178] sm:$0xff]
        %v406 = vld [vmem:[%s309 + $0x180] sm:$0xff]
        %v407 = vld [vmem:[%s309 + $0x188] sm:$0xff]
        %v408 = vld [vmem:[%s309 + $0x190] sm:$0xff]
        %v409 = vld [vmem:[%s309 + $0x198] sm:$0xff]
        %v410 = vld [vmem:[%s309 + $0x1a0] sm:$0xff]
        %v411 = vld [vmem:[%s309 + $0x1a8] sm:$0xff]
        %v412 = vld [vmem:[%s309 + $0x1b0] sm:$0xff]
        %v413 = vld [vmem:[%s309 + $0x1b8] sm:$0xff]
        %v414 = vld [vmem:[%s309 + $0x1c0] sm:$0xff]
        %v415 = vld [vmem:[%s309 + $0x1c8] sm:$0xff]
        %v416 = vld [vmem:[%s309 + $0x1d0] sm:$0xff]
        %v417 = vld [vmem:[%s309 + $0x1d8] sm:$0xff]
        %v418 = vld [vmem:[%s309 + $0x1e0] sm:$0xff]
        %v419 = vld [vmem:[%s309 + $0x1e8] sm:$0xff]
        %v420 = vld [vmem:[%s309 + $0x1f0] sm:$0xff]
        %v421 = vld [vmem:[%s309 + $0x1f8] sm:$0xff]
        %v422 = vld [vmem:[%s309 + $0x200] sm:$0xff]
        %v423 = vld [vmem:[%s309 + $0x208] sm:$0xff]
        %v424 = vld [vmem:[%s309 + $0x210] sm:$0xff]
        %v425 = vld [vmem:[%s309 + $0x218] sm:$0xff]
        %v426 = vld [vmem:[%s309 + $0x220] sm:$0xff]
        %v427 = vld [vmem:[%s309 + $0x228] sm:$0xff]
        %v428 = vld [vmem:[%s309 + $0x230] sm:$0xff]
        %v429 = vld [vmem:[%s309 + $0x238] sm:$0xff]
        %v430 = vld [vmem:[%s309 + $0x240] sm:$0xff]
        %v431 = vld [vmem:[%s309 + $0x248] sm:$0xff]
        %v432 = vld [vmem:[%s309 + $0x250] sm:$0xff]
        %v433 = vld [vmem:[%s309 + $0x258] sm:$0xff]
        %v434 = vld [vmem:[%s309 + $0x260] sm:$0xff]
        %v435 = vld [vmem:[%s309 + $0x268] sm:$0xff]
        %v436 = vld [vmem:[%s309 + $0x270] sm:$0xff]
        %v437 = vld [vmem:[%s309 + $0x278] sm:$0xff]
        %438 = vadd.xlane.f32.xlu0 %v358
        %v439 = vpop.xlane.xlu0 %438
        %440 = vadd.xlane.f32.xlu0 %v359
        %v441 = vpop.xlane.xlu0 %440
        %442 = vadd.xlane.f32.xlu0 %v360
        %v443 = vpop.xlane.xlu0 %442
        %444 = vadd.xlane.f32.xlu0 %v361
        %v445 = vpop.xlane.xlu0 %444
        %446 = vadd.xlane.f32.xlu0 %v362
        %v447 = vpop.xlane.xlu0 %446
        %448 = vadd.xlane.f32.xlu0 %v363
        %v449 = vpop.xlane.xlu0 %448
        %450 = vadd.xlane.f32.xlu0 %v364
        %v451 = vpop.xlane.xlu0 %450
        %452 = vadd.xlane.f32.xlu0 %v365
        %v453 = vpop.xlane.xlu0 %452
        %454 = vadd.xlane.f32.xlu0 %v366
        %v455 = vpop.xlane.xlu0 %454
        %456 = vadd.xlane.f32.xlu0 %v367
        %v457 = vpop.xlane.xlu0 %456
        %458 = vadd.xlane.f32.xlu0 %v368
        %v459 = vpop.xlane.xlu0 %458
        %460 = vadd.xlane.f32.xlu0 %v369
        %v461 = vpop.xlane.xlu0 %460
        %462 = vadd.xlane.f32.xlu0 %v370
        %v463 = vpop.xlane.xlu0 %462
        %464 = vadd.xlane.f32.xlu0 %v371
        %v465 = vpop.xlane.xlu0 %464
        %466 = vadd.xlane.f32.xlu0 %v372
        %v467 = vpop.xlane.xlu0 %466
        %468 = vadd.xlane.f32.xlu0 %v373
        %v469 = vpop.xlane.xlu0 %468
        %470 = vadd.xlane.f32.xlu0 %v374
        %v471 = vpop.xlane.xlu0 %470
        %472 = vadd.xlane.f32.xlu0 %v375
        %v473 = vpop.xlane.xlu0 %472
        %474 = vadd.xlane.f32.xlu0 %v376
        %v475 = vpop.xlane.xlu0 %474
        %476 = vadd.xlane.f32.xlu0 %v377
        %v477 = vpop.xlane.xlu0 %476
        %478 = vadd.xlane.f32.xlu0 %v378
        %v479 = vpop.xlane.xlu0 %478
        %480 = vadd.xlane.f32.xlu0 %v379
        %v481 = vpop.xlane.xlu0 %480
        %482 = vadd.xlane.f32.xlu0 %v380
        %v483 = vpop.xlane.xlu0 %482
        %484 = vadd.xlane.f32.xlu0 %v381
        %v485 = vpop.xlane.xlu0 %484
        %486 = vadd.xlane.f32.xlu0 %v382
        %v487 = vpop.xlane.xlu0 %486
        %488 = vadd.xlane.f32.xlu0 %v383
        %v489 = vpop.xlane.xlu0 %488
        %490 = vadd.xlane.f32.xlu0 %v384
        %v491 = vpop.xlane.xlu0 %490
        %492 = vadd.xlane.f32.xlu0 %v385
        %v493 = vpop.xlane.xlu0 %492
        %494 = vadd.xlane.f32.xlu0 %v386
        %v495 = vpop.xlane.xlu0 %494
        %496 = vadd.xlane.f32.xlu0 %v387
        %v497 = vpop.xlane.xlu0 %496
        %498 = vadd.xlane.f32.xlu0 %v388
        %v499 = vpop.xlane.xlu0 %498
        %500 = vadd.xlane.f32.xlu0 %v389
        %v501 = vpop.xlane.xlu0 %500
        %502 = vadd.xlane.f32.xlu0 %v390
        %v503 = vpop.xlane.xlu0 %502
        %504 = vadd.xlane.f32.xlu0 %v391
        %v505 = vpop.xlane.xlu0 %504
        %506 = vadd.xlane.f32.xlu0 %v392
        %v507 = vpop.xlane.xlu0 %506
        %508 = vadd.xlane.f32.xlu0 %v393
        %v509 = vpop.xlane.xlu0 %508
        %510 = vadd.xlane.f32.xlu0 %v394
        %v511 = vpop.xlane.xlu0 %510
        %512 = vadd.xlane.f32.xlu0 %v395
        %v513 = vpop.xlane.xlu0 %512
        %514 = vadd.xlane.f32.xlu0 %v396
        %v515 = vpop.xlane.xlu0 %514
        %516 = vadd.xlane.f32.xlu0 %v397
        %v517 = vpop.xlane.xlu0 %516
        %518 = vadd.xlane.f32.xlu0 %v398
        %v519 = vpop.xlane.xlu0 %518
        %520 = vadd.xlane.f32.xlu0 %v399
        %v521 = vpop.xlane.xlu0 %520
        %522 = vadd.xlane.f32.xlu0 %v400
        %v523 = vpop.xlane.xlu0 %522
        %524 = vadd.xlane.f32.xlu0 %v401
        %v525 = vpop.xlane.xlu0 %524
        %526 = vadd.xlane.f32.xlu0 %v402
        %v527 = vpop.xlane.xlu0 %526
        %528 = vadd.xlane.f32.xlu0 %v403
        %v529 = vpop.xlane.xlu0 %528
        %530 = vadd.xlane.f32.xlu0 %v404
        %v531 = vpop.xlane.xlu0 %530
        %532 = vadd.xlane.f32.xlu0 %v405
        %v533 = vpop.xlane.xlu0 %532
        %534 = vadd.xlane.f32.xlu0 %v406
        %v535 = vpop.xlane.xlu0 %534
        %536 = vadd.xlane.f32.xlu0 %v407
        %v537 = vpop.xlane.xlu0 %536
        %538 = vadd.xlane.f32.xlu0 %v408
        %v539 = vpop.xlane.xlu0 %538
        %540 = vadd.xlane.f32.xlu0 %v409
        %v541 = vpop.xlane.xlu0 %540
        %542 = vadd.xlane.f32.xlu0 %v410
        %v543 = vpop.xlane.xlu0 %542
        %544 = vadd.xlane.f32.xlu0 %v411
        %v545 = vpop.xlane.xlu0 %544
        %546 = vadd.xlane.f32.xlu0 %v412
        %v547 = vpop.xlane.xlu0 %546
        %548 = vadd.xlane.f32.xlu0 %v413
        %v549 = vpop.xlane.xlu0 %548
        %550 = vadd.xlane.f32.xlu0 %v414
        %v551 = vpop.xlane.xlu0 %550
        %552 = vadd.xlane.f32.xlu0 %v415
        %v553 = vpop.xlane.xlu0 %552
        %554 = vadd.xlane.f32.xlu0 %v416
        %v555 = vpop.xlane.xlu0 %554
        %556 = vadd.xlane.f32.xlu0 %v417
        %v557 = vpop.xlane.xlu0 %556
        %558 = vadd.xlane.f32.xlu0 %v418
        %v559 = vpop.xlane.xlu0 %558
        %560 = vadd.xlane.f32.xlu0 %v419
        %v561 = vpop.xlane.xlu0 %560
        %562 = vadd.xlane.f32.xlu0 %v420
        %v563 = vpop.xlane.xlu0 %562
        %564 = vadd.xlane.f32.xlu0 %v421
        %v565 = vpop.xlane.xlu0 %564
        %566 = vadd.xlane.f32.xlu0 %v422
        %v567 = vpop.xlane.xlu0 %566
        %568 = vadd.xlane.f32.xlu0 %v423
        %v569 = vpop.xlane.xlu0 %568
        %570 = vadd.xlane.f32.xlu0 %v424
        %v571 = vpop.xlane.xlu0 %570
        %572 = vadd.xlane.f32.xlu0 %v425
        %v573 = vpop.xlane.xlu0 %572
        %574 = vadd.xlane.f32.xlu0 %v426
        %v575 = vpop.xlane.xlu0 %574
        %576 = vadd.xlane.f32.xlu0 %v427
        %v577 = vpop.xlane.xlu0 %576
        %578 = vadd.xlane.f32.xlu0 %v428
        %v579 = vpop.xlane.xlu0 %578
        %580 = vadd.xlane.f32.xlu0 %v429
        %v581 = vpop.xlane.xlu0 %580
        %582 = vadd.xlane.f32.xlu0 %v430
        %v583 = vpop.xlane.xlu0 %582
        %584 = vadd.xlane.f32.xlu0 %v431
        %v585 = vpop.xlane.xlu0 %584
        %586 = vadd.xlane.f32.xlu0 %v432
        %v587 = vpop.xlane.xlu0 %586
        %588 = vadd.xlane.f32.xlu0 %v433
        %v589 = vpop.xlane.xlu0 %588
        %590 = vadd.xlane.f32.xlu0 %v434
        %v591 = vpop.xlane.xlu0 %590
        %592 = vadd.xlane.f32.xlu0 %v435
        %v593 = vpop.xlane.xlu0 %592
        %594 = vadd.xlane.f32.xlu0 %v436
        %v595 = vpop.xlane.xlu0 %594
        %596 = vadd.xlane.f32.xlu0 %v437
        %v597 = vpop.xlane.xlu0 %596
        %v598 = vadd.f32 %v439, %v441
        %v599 = vadd.f32 %v598, %v443
        %v600 = vadd.f32 %v599, %v445
        %v601 = vadd.f32 %v600, %v447
        %v602 = vadd.f32 %v601, %v449
        %v603 = vadd.f32 %v602, %v451
        %v604 = vadd.f32 %v603, %v453
        %v605 = vrot.slane %v604, 4
        %v606 = vadd.f32 %v604, %v605
        %v607 = vrot.slane %v606, 2
        %v608 = vadd.f32 %v606, %v607
        %v609 = vrot.slane %v608, 1
        %v610 = vadd.f32 %v608, %v609
        %v611 = vadd.f32 %v455, %v457
        %v612 = vadd.f32 %v611, %v459
        %v613 = vadd.f32 %v612, %v461
        %v614 = vadd.f32 %v613, %v463
        %v615 = vadd.f32 %v614, %v465
        %v616 = vadd.f32 %v615, %v467
        %v617 = vadd.f32 %v616, %v469
        %v618 = vrot.slane %v617, 4
        %v619 = vadd.f32 %v617, %v618
        %v620 = vrot.slane %v619, 2
        %v621 = vadd.f32 %v619, %v620
        %v622 = vrot.slane %v621, 1
        %v623 = vadd.f32 %v621, %v622
        %v624 = vadd.f32 %v471, %v473
        %v625 = vadd.f32 %v624, %v475
        %v626 = vadd.f32 %v625, %v477
        %v627 = vadd.f32 %v626, %v479
        %v628 = vadd.f32 %v627, %v481
        %v629 = vadd.f32 %v628, %v483
        %v630 = vadd.f32 %v629, %v485
        %v631 = vrot.slane %v630, 4
        %v632 = vadd.f32 %v630, %v631
        %v633 = vrot.slane %v632, 2
        %v634 = vadd.f32 %v632, %v633
        %v635 = vrot.slane %v634, 1
        %v636 = vadd.f32 %v634, %v635
        %v637 = vadd.f32 %v487, %v489
        %v638 = vadd.f32 %v637, %v491
        %v639 = vadd.f32 %v638, %v493
        %v640 = vadd.f32 %v639, %v495
        %v641 = vadd.f32 %v640, %v497
        %v642 = vadd.f32 %v641, %v499
        %v643 = vadd.f32 %v642, %v501
        %v644 = vrot.slane %v643, 4
        %v645 = vadd.f32 %v643, %v644
        %v646 = vrot.slane %v645, 2
        %v647 = vadd.f32 %v645, %v646
        %v648 = vrot.slane %v647, 1
        %v649 = vadd.f32 %v647, %v648
        %v650 = vadd.f32 %v503, %v505
        %v651 = vadd.f32 %v650, %v507
        %v652 = vadd.f32 %v651, %v509
        %v653 = vadd.f32 %v652, %v511
        %v654 = vadd.f32 %v653, %v513
        %v655 = vadd.f32 %v654, %v515
        %v656 = vadd.f32 %v655, %v517
        %v657 = vrot.slane %v656, 4
        %v658 = vadd.f32 %v656, %v657
        %v659 = vrot.slane %v658, 2
        %v660 = vadd.f32 %v658, %v659
        %v661 = vrot.slane %v660, 1
        %v662 = vadd.f32 %v660, %v661
        %v663 = vadd.f32 %v519, %v521
        %v664 = vadd.f32 %v663, %v523
        %v665 = vadd.f32 %v664, %v525
        %v666 = vadd.f32 %v665, %v527
        %v667 = vadd.f32 %v666, %v529
        %v668 = vadd.f32 %v667, %v531
        %v669 = vadd.f32 %v668, %v533
        %v670 = vrot.slane %v669, 4
        %v671 = vadd.f32 %v669, %v670
        %v672 = vrot.slane %v671, 2
        %v673 = vadd.f32 %v671, %v672
        %v674 = vrot.slane %v673, 1
        %v675 = vadd.f32 %v673, %v674
        %v676 = vadd.f32 %v535, %v537
        %v677 = vadd.f32 %v676, %v539
        %v678 = vadd.f32 %v677, %v541
        %v679 = vadd.f32 %v678, %v543
        %v680 = vadd.f32 %v679, %v545
        %v681 = vadd.f32 %v680, %v547
        %v682 = vadd.f32 %v681, %v549
        %v683 = vrot.slane %v682, 4
        %v684 = vadd.f32 %v682, %v683
        %v685 = vrot.slane %v684, 2
        %v686 = vadd.f32 %v684, %v685
        %v687 = vrot.slane %v686, 1
        %v688 = vadd.f32 %v686, %v687
        %v689 = vadd.f32 %v551, %v553
        %v690 = vadd.f32 %v689, %v555
        %v691 = vadd.f32 %v690, %v557
        %v692 = vadd.f32 %v691, %v559
        %v693 = vadd.f32 %v692, %v561
        %v694 = vadd.f32 %v693, %v563
        %v695 = vadd.f32 %v694, %v565
        %v696 = vrot.slane %v695, 4
        %v697 = vadd.f32 %v695, %v696
        %v698 = vrot.slane %v697, 2
        %v699 = vadd.f32 %v697, %v698
        %v700 = vrot.slane %v699, 1
        %v701 = vadd.f32 %v699, %v700
        %v702 = vadd.f32 %v567, %v569
        %v703 = vadd.f32 %v702, %v571
        %v704 = vadd.f32 %v703, %v573
        %v705 = vadd.f32 %v704, %v575
        %v706 = vadd.f32 %v705, %v577
        %v707 = vadd.f32 %v706, %v579
        %v708 = vadd.f32 %v707, %v581
        %v709 = vrot.slane %v708, 4
        %v710 = vadd.f32 %v708, %v709
        %v711 = vrot.slane %v710, 2
        %v712 = vadd.f32 %v710, %v711
        %v713 = vrot.slane %v712, 1
        %v714 = vadd.f32 %v712, %v713
        %v715 = vadd.f32 %v583, %v585
        %v716 = vadd.f32 %v715, %v587
        %v717 = vadd.f32 %v716, %v589
        %v718 = vadd.f32 %v717, %v591
        %v719 = vadd.f32 %v718, %v593
        %v720 = vadd.f32 %v719, %v595
        %v721 = vadd.f32 %v720, %v597
        %v722 = vrot.slane %v721, 4
        %v723 = vadd.f32 %v721, %v722
        %v724 = vrot.slane %v723, 2
        %v725 = vadd.f32 %v723, %v724
        %v726 = vrot.slane %v725, 1
        %v727 = vadd.f32 %v725, %v726
        %v728 = vmul.f32 %v610, 0.00012207031
        %v729 = vmul.f32 %v623, 0.00012207031
        %v730 = vmul.f32 %v636, 0.00012207031
        %v731 = vmul.f32 %v649, 0.00012207031
        %v732 = vmul.f32 %v662, 0.00012207031
        %v733 = vmul.f32 %v675, 0.00012207031
        %v734 = vmul.f32 %v688, 0.00012207031
        %v735 = vmul.f32 %v701, 0.00012207031
        %v736 = vmul.f32 %v714, 0.00012207031
        %v737 = vmul.f32 %v727, 0.00012207031
        %v738 = vsub.f32 %v358, %v728
        %v739 = vsub.f32 %v359, %v728
        %v740 = vsub.f32 %v360, %v728
        %v741 = vsub.f32 %v361, %v728
        %v742 = vsub.f32 %v362, %v728
        %v743 = vsub.f32 %v363, %v728
        %v744 = vsub.f32 %v364, %v728
        %v745 = vsub.f32 %v365, %v728
        %v746 = vsub.f32 %v366, %v729
        %v747 = vsub.f32 %v367, %v729
        %v748 = vsub.f32 %v368, %v729
        %v749 = vsub.f32 %v369, %v729
        %v750 = vsub.f32 %v370, %v729
        %v751 = vsub.f32 %v371, %v729
        %v752 = vsub.f32 %v372, %v729
        %v753 = vsub.f32 %v373, %v729
        %v754 = vsub.f32 %v374, %v730
        %v755 = vsub.f32 %v375, %v730
        %v756 = vsub.f32 %v376, %v730
        %v757 = vsub.f32 %v377, %v730
        %v758 = vsub.f32 %v378, %v730
        %v759 = vsub.f32 %v379, %v730
        %v760 = vsub.f32 %v380, %v730
        %v761 = vsub.f32 %v381, %v730
        %v762 = vsub.f32 %v382, %v731
        %v763 = vsub.f32 %v383, %v731
        %v764 = vsub.f32 %v384, %v731
        %v765 = vsub.f32 %v385, %v731
        %v766 = vsub.f32 %v386, %v731
        %v767 = vsub.f32 %v387, %v731
        %v768 = vsub.f32 %v388, %v731
        %v769 = vsub.f32 %v389, %v731
        %v770 = vsub.f32 %v390, %v732
        %v771 = vsub.f32 %v391, %v732
        %v772 = vsub.f32 %v392, %v732
        %v773 = vsub.f32 %v393, %v732
        %v774 = vsub.f32 %v394, %v732
        %v775 = vsub.f32 %v395, %v732
        %v776 = vsub.f32 %v396, %v732
        %v777 = vsub.f32 %v397, %v732
        %v778 = vsub.f32 %v398, %v733
        %v779 = vsub.f32 %v399, %v733
        %v780 = vsub.f32 %v400, %v733
        %v781 = vsub.f32 %v401, %v733
        %v782 = vsub.f32 %v402, %v733
        %v783 = vsub.f32 %v403, %v733
        %v784 = vsub.f32 %v404, %v733
        %v785 = vsub.f32 %v405, %v733
        %v786 = vsub.f32 %v406, %v734
        %v787 = vsub.f32 %v407, %v734
        %v788 = vsub.f32 %v408, %v734
        %v789 = vsub.f32 %v409, %v734
        %v790 = vsub.f32 %v410, %v734
        %v791 = vsub.f32 %v411, %v734
        %v792 = vsub.f32 %v412, %v734
        %v793 = vsub.f32 %v413, %v734
        %v794 = vsub.f32 %v414, %v735
        %v795 = vsub.f32 %v415, %v735
        %v796 = vsub.f32 %v416, %v735
        %v797 = vsub.f32 %v417, %v735
        %v798 = vsub.f32 %v418, %v735
        %v799 = vsub.f32 %v419, %v735
        %v800 = vsub.f32 %v420, %v735
        %v801 = vsub.f32 %v421, %v735
        %v802 = vsub.f32 %v422, %v736
        %v803 = vsub.f32 %v423, %v736
        %v804 = vsub.f32 %v424, %v736
        %v805 = vsub.f32 %v425, %v736
        %v806 = vsub.f32 %v426, %v736
        %v807 = vsub.f32 %v427, %v736
        %v808 = vsub.f32 %v428, %v736
        %v809 = vsub.f32 %v429, %v736
        %v810 = vsub.f32 %v430, %v737
        %v811 = vsub.f32 %v431, %v737
        %v812 = vsub.f32 %v432, %v737
        %v813 = vsub.f32 %v433, %v737
        %v814 = vsub.f32 %v434, %v737
        %v815 = vsub.f32 %v435, %v737
        %v816 = vsub.f32 %v436, %v737
        %v817 = vsub.f32 %v437, %v737
        %v818 = vmul.f32 %v738, %v738
        %v819 = vmul.f32 %v739, %v739
        %v820 = vmul.f32 %v740, %v740
        %v821 = vmul.f32 %v741, %v741
        %v822 = vmul.f32 %v742, %v742
        %v823 = vmul.f32 %v743, %v743
        %v824 = vmul.f32 %v744, %v744
        %v825 = vmul.f32 %v745, %v745
        %v826 = vmul.f32 %v746, %v746
        %v827 = vmul.f32 %v747, %v747
        %v828 = vmul.f32 %v748, %v748
        %v829 = vmul.f32 %v749, %v749
        %v830 = vmul.f32 %v750, %v750
        %v831 = vmul.f32 %v751, %v751
        %v832 = vmul.f32 %v752, %v752
        %v833 = vmul.f32 %v753, %v753
        %v834 = vmul.f32 %v754, %v754
        %v835 = vmul.f32 %v755, %v755
        %v836 = vmul.f32 %v756, %v756
        %v837 = vmul.f32 %v757, %v757
        %v838 = vmul.f32 %v758, %v758
        %v839 = vmul.f32 %v759, %v759
        %v840 = vmul.f32 %v760, %v760
        %v841 = vmul.f32 %v761, %v761
        %v842 = vmul.f32 %v762, %v762
        %v843 = vmul.f32 %v763, %v763
        %v844 = vmul.f32 %v764, %v764
        %v845 = vmul.f32 %v765, %v765
        %v846 = vmul.f32 %v766, %v766
        %v847 = vmul.f32 %v767, %v767
        %v848 = vmul.f32 %v768, %v768
        %v849 = vmul.f32 %v769, %v769
        %v850 = vmul.f32 %v770, %v770
        %v851 = vmul.f32 %v771, %v771
        %v852 = vmul.f32 %v772, %v772
        %v853 = vmul.f32 %v773, %v773
        %v854 = vmul.f32 %v774, %v774
        %v855 = vmul.f32 %v775, %v775
        %v856 = vmul.f32 %v776, %v776
        %v857 = vmul.f32 %v777, %v777
        %v858 = vmul.f32 %v778, %v778
        %v859 = vmul.f32 %v779, %v779
        %v860 = vmul.f32 %v780, %v780
        %v861 = vmul.f32 %v781, %v781
        %v862 = vmul.f32 %v782, %v782
        %v863 = vmul.f32 %v783, %v783
        %v864 = vmul.f32 %v784, %v784
        %v865 = vmul.f32 %v785, %v785
        %v866 = vmul.f32 %v786, %v786
        %v867 = vmul.f32 %v787, %v787
        %v868 = vmul.f32 %v788, %v788
        %v869 = vmul.f32 %v789, %v789
        %v870 = vmul.f32 %v790, %v790
        %v871 = vmul.f32 %v791, %v791
        %v872 = vmul.f32 %v792, %v792
        %v873 = vmul.f32 %v793, %v793
        %v874 = vmul.f32 %v794, %v794
        %v875 = vmul.f32 %v795, %v795
        %v876 = vmul.f32 %v796, %v796
        %v877 = vmul.f32 %v797, %v797
        %v878 = vmul.f32 %v798, %v798
        %v879 = vmul.f32 %v799, %v799
        %v880 = vmul.f32 %v800, %v800
        %v881 = vmul.f32 %v801, %v801
        %v882 = vmul.f32 %v802, %v802
        %v883 = vmul.f32 %v803, %v803
        %v884 = vmul.f32 %v804, %v804
        %v885 = vmul.f32 %v805, %v805
        %v886 = vmul.f32 %v806, %v806
        %v887 = vmul.f32 %v807, %v807
        %v888 = vmul.f32 %v808, %v808
        %v889 = vmul.f32 %v809, %v809
        %v890 = vmul.f32 %v810, %v810
        %v891 = vmul.f32 %v811, %v811
        %v892 = vmul.f32 %v812, %v812
        %v893 = vmul.f32 %v813, %v813
        %v894 = vmul.f32 %v814, %v814
        %v895 = vmul.f32 %v815, %v815
        %v896 = vmul.f32 %v816, %v816
        %v897 = vmul.f32 %v817, %v817
        %898 = vadd.xlane.f32.xlu0 %v818
        %v899 = vpop.xlane.xlu0 %898
        %900 = vadd.xlane.f32.xlu0 %v819
        %v901 = vpop.xlane.xlu0 %900
        %902 = vadd.xlane.f32.xlu0 %v820
        %v903 = vpop.xlane.xlu0 %902
        %904 = vadd.xlane.f32.xlu0 %v821
        %v905 = vpop.xlane.xlu0 %904
        %906 = vadd.xlane.f32.xlu0 %v822
        %v907 = vpop.xlane.xlu0 %906
        %908 = vadd.xlane.f32.xlu0 %v823
        %v909 = vpop.xlane.xlu0 %908
        %910 = vadd.xlane.f32.xlu0 %v824
        %v911 = vpop.xlane.xlu0 %910
        %912 = vadd.xlane.f32.xlu0 %v825
        %v913 = vpop.xlane.xlu0 %912
        %914 = vadd.xlane.f32.xlu0 %v826
        %v915 = vpop.xlane.xlu0 %914
        %916 = vadd.xlane.f32.xlu0 %v827
        %v917 = vpop.xlane.xlu0 %916
        %918 = vadd.xlane.f32.xlu0 %v828
        %v919 = vpop.xlane.xlu0 %918
        %920 = vadd.xlane.f32.xlu0 %v829
        %v921 = vpop.xlane.xlu0 %920
        %922 = vadd.xlane.f32.xlu0 %v830
        %v923 = vpop.xlane.xlu0 %922
        %924 = vadd.xlane.f32.xlu0 %v831
        %v925 = vpop.xlane.xlu0 %924
        %926 = vadd.xlane.f32.xlu0 %v832
        %v927 = vpop.xlane.xlu0 %926
        %928 = vadd.xlane.f32.xlu0 %v833
        %v929 = vpop.xlane.xlu0 %928
        %930 = vadd.xlane.f32.xlu0 %v834
        %v931 = vpop.xlane.xlu0 %930
        %932 = vadd.xlane.f32.xlu0 %v835
        %v933 = vpop.xlane.xlu0 %932
        %934 = vadd.xlane.f32.xlu0 %v836
        %v935 = vpop.xlane.xlu0 %934
        %936 = vadd.xlane.f32.xlu0 %v837
        %v937 = vpop.xlane.xlu0 %936
        %938 = vadd.xlane.f32.xlu0 %v838
        %v939 = vpop.xlane.xlu0 %938
        %940 = vadd.xlane.f32.xlu0 %v839
        %v941 = vpop.xlane.xlu0 %940
        %942 = vadd.xlane.f32.xlu0 %v840
        %v943 = vpop.xlane.xlu0 %942
        %944 = vadd.xlane.f32.xlu0 %v841
        %v945 = vpop.xlane.xlu0 %944
        %946 = vadd.xlane.f32.xlu0 %v842
        %v947 = vpop.xlane.xlu0 %946
        %948 = vadd.xlane.f32.xlu0 %v843
        %v949 = vpop.xlane.xlu0 %948
        %950 = vadd.xlane.f32.xlu0 %v844
        %v951 = vpop.xlane.xlu0 %950
        %952 = vadd.xlane.f32.xlu0 %v845
        %v953 = vpop.xlane.xlu0 %952
        %954 = vadd.xlane.f32.xlu0 %v846
        %v955 = vpop.xlane.xlu0 %954
        %956 = vadd.xlane.f32.xlu0 %v847
        %v957 = vpop.xlane.xlu0 %956
        %958 = vadd.xlane.f32.xlu0 %v848
        %v959 = vpop.xlane.xlu0 %958
        %960 = vadd.xlane.f32.xlu0 %v849
        %v961 = vpop.xlane.xlu0 %960
        %962 = vadd.xlane.f32.xlu0 %v850
        %v963 = vpop.xlane.xlu0 %962
        %964 = vadd.xlane.f32.xlu0 %v851
        %v965 = vpop.xlane.xlu0 %964
        %966 = vadd.xlane.f32.xlu0 %v852
        %v967 = vpop.xlane.xlu0 %966
        %968 = vadd.xlane.f32.xlu0 %v853
        %v969 = vpop.xlane.xlu0 %968
        %970 = vadd.xlane.f32.xlu0 %v854
        %v971 = vpop.xlane.xlu0 %970
        %972 = vadd.xlane.f32.xlu0 %v855
        %v973 = vpop.xlane.xlu0 %972
        %974 = vadd.xlane.f32.xlu0 %v856
        %v975 = vpop.xlane.xlu0 %974
        %976 = vadd.xlane.f32.xlu0 %v857
        %v977 = vpop.xlane.xlu0 %976
        %978 = vadd.xlane.f32.xlu0 %v858
        %v979 = vpop.xlane.xlu0 %978
        %980 = vadd.xlane.f32.xlu0 %v859
        %v981 = vpop.xlane.xlu0 %980
        %982 = vadd.xlane.f32.xlu0 %v860
        %v983 = vpop.xlane.xlu0 %982
        %984 = vadd.xlane.f32.xlu0 %v861
        %v985 = vpop.xlane.xlu0 %984
        %986 = vadd.xlane.f32.xlu0 %v862
        %v987 = vpop.xlane.xlu0 %986
        %988 = vadd.xlane.f32.xlu0 %v863
        %v989 = vpop.xlane.xlu0 %988
        %990 = vadd.xlane.f32.xlu0 %v864
        %v991 = vpop.xlane.xlu0 %990
        %992 = vadd.xlane.f32.xlu0 %v865
        %v993 = vpop.xlane.xlu0 %992
        %994 = vadd.xlane.f32.xlu0 %v866
        %v995 = vpop.xlane.xlu0 %994
        %996 = vadd.xlane.f32.xlu0 %v867
        %v997 = vpop.xlane.xlu0 %996
        %998 = vadd.xlane.f32.xlu0 %v868
        %v999 = vpop.xlane.xlu0 %998
        %1000 = vadd.xlane.f32.xlu0 %v869
        %v1001 = vpop.xlane.xlu0 %1000
        %1002 = vadd.xlane.f32.xlu0 %v870
        %v1003 = vpop.xlane.xlu0 %1002
        %1004 = vadd.xlane.f32.xlu0 %v871
        %v1005 = vpop.xlane.xlu0 %1004
        %1006 = vadd.xlane.f32.xlu0 %v872
        %v1007 = vpop.xlane.xlu0 %1006
        %1008 = vadd.xlane.f32.xlu0 %v873
        %v1009 = vpop.xlane.xlu0 %1008
        %1010 = vadd.xlane.f32.xlu0 %v874
        %v1011 = vpop.xlane.xlu0 %1010
        %1012 = vadd.xlane.f32.xlu0 %v875
        %v1013 = vpop.xlane.xlu0 %1012
        %1014 = vadd.xlane.f32.xlu0 %v876
        %v1015 = vpop.xlane.xlu0 %1014
        %1016 = vadd.xlane.f32.xlu0 %v877
        %v1017 = vpop.xlane.xlu0 %1016
        %1018 = vadd.xlane.f32.xlu0 %v878
        %v1019 = vpop.xlane.xlu0 %1018
        %1020 = vadd.xlane.f32.xlu0 %v879
        %v1021 = vpop.xlane.xlu0 %1020
        %1022 = vadd.xlane.f32.xlu0 %v880
        %v1023 = vpop.xlane.xlu0 %1022
        %1024 = vadd.xlane.f32.xlu0 %v881
        %v1025 = vpop.xlane.xlu0 %1024
        %1026 = vadd.xlane.f32.xlu0 %v882
        %v1027 = vpop.xlane.xlu0 %1026
        %1028 = vadd.xlane.f32.xlu0 %v883
        %v1029 = vpop.xlane.xlu0 %1028
        %1030 = vadd.xlane.f32.xlu0 %v884
        %v1031 = vpop.xlane.xlu0 %1030
        %1032 = vadd.xlane.f32.xlu0 %v885
        %v1033 = vpop.xlane.xlu0 %1032
        %1034 = vadd.xlane.f32.xlu0 %v886
        %v1035 = vpop.xlane.xlu0 %1034
        %1036 = vadd.xlane.f32.xlu0 %v887
        %v1037 = vpop.xlane.xlu0 %1036
        %1038 = vadd.xlane.f32.xlu0 %v888
        %v1039 = vpop.xlane.xlu0 %1038
        %1040 = vadd.xlane.f32.xlu0 %v889
        %v1041 = vpop.xlane.xlu0 %1040
        %1042 = vadd.xlane.f32.xlu0 %v890
        %v1043 = vpop.xlane.xlu0 %1042
        %1044 = vadd.xlane.f32.xlu0 %v891
        %v1045 = vpop.xlane.xlu0 %1044
        %1046 = vadd.xlane.f32.xlu0 %v892
        %v1047 = vpop.xlane.xlu0 %1046
        %1048 = vadd.xlane.f32.xlu0 %v893
        %v1049 = vpop.xlane.xlu0 %1048
        %1050 = vadd.xlane.f32.xlu0 %v894
        %v1051 = vpop.xlane.xlu0 %1050
        %1052 = vadd.xlane.f32.xlu0 %v895
        %v1053 = vpop.xlane.xlu0 %1052
        %1054 = vadd.xlane.f32.xlu0 %v896
        %v1055 = vpop.xlane.xlu0 %1054
        %1056 = vadd.xlane.f32.xlu0 %v897
        %v1057 = vpop.xlane.xlu0 %1056
        %v1058 = vadd.f32 %v899, %v901
        %v1059 = vadd.f32 %v1058, %v903
        %v1060 = vadd.f32 %v1059, %v905
        %v1061 = vadd.f32 %v1060, %v907
        %v1062 = vadd.f32 %v1061, %v909
        %v1063 = vadd.f32 %v1062, %v911
        %v1064 = vadd.f32 %v1063, %v913
        %v1065 = vrot.slane %v1064, 4
        %v1066 = vadd.f32 %v1064, %v1065
        %v1067 = vrot.slane %v1066, 2
        %v1068 = vadd.f32 %v1066, %v1067
        %v1069 = vrot.slane %v1068, 1
        %v1070 = vadd.f32 %v1068, %v1069
        %v1071 = vadd.f32 %v915, %v917
        %v1072 = vadd.f32 %v1071, %v919
        %v1073 = vadd.f32 %v1072, %v921
        %v1074 = vadd.f32 %v1073, %v923
        %v1075 = vadd.f32 %v1074, %v925
        %v1076 = vadd.f32 %v1075, %v927
        %v1077 = vadd.f32 %v1076, %v929
        %v1078 = vrot.slane %v1077, 4
        %v1079 = vadd.f32 %v1077, %v1078
        %v1080 = vrot.slane %v1079, 2
        %v1081 = vadd.f32 %v1079, %v1080
        %v1082 = vrot.slane %v1081, 1
        %v1083 = vadd.f32 %v1081, %v1082
        %v1084 = vadd.f32 %v931, %v933
        %v1085 = vadd.f32 %v1084, %v935
        %v1086 = vadd.f32 %v1085, %v937
        %v1087 = vadd.f32 %v1086, %v939
        %v1088 = vadd.f32 %v1087, %v941
        %v1089 = vadd.f32 %v1088, %v943
        %v1090 = vadd.f32 %v1089, %v945
        %v1091 = vrot.slane %v1090, 4
        %v1092 = vadd.f32 %v1090, %v1091
        %v1093 = vrot.slane %v1092, 2
        %v1094 = vadd.f32 %v1092, %v1093
        %v1095 = vrot.slane %v1094, 1
        %v1096 = vadd.f32 %v1094, %v1095
        %v1097 = vadd.f32 %v947, %v949
        %v1098 = vadd.f32 %v1097, %v951
        %v1099 = vadd.f32 %v1098, %v953
        %v1100 = vadd.f32 %v1099, %v955
        %v1101 = vadd.f32 %v1100, %v957
        %v1102 = vadd.f32 %v1101, %v959
        %v1103 = vadd.f32 %v1102, %v961
        %v1104 = vrot.slane %v1103, 4
        %v1105 = vadd.f32 %v1103, %v1104
        %v1106 = vrot.slane %v1105, 2
        %v1107 = vadd.f32 %v1105, %v1106
        %v1108 = vrot.slane %v1107, 1
        %v1109 = vadd.f32 %v1107, %v1108
        %v1110 = vadd.f32 %v963, %v965
        %v1111 = vadd.f32 %v1110, %v967
        %v1112 = vadd.f32 %v1111, %v969
        %v1113 = vadd.f32 %v1112, %v971
        %v1114 = vadd.f32 %v1113, %v973
        %v1115 = vadd.f32 %v1114, %v975
        %v1116 = vadd.f32 %v1115, %v977
        %v1117 = vrot.slane %v1116, 4
        %v1118 = vadd.f32 %v1116, %v1117
        %v1119 = vrot.slane %v1118, 2
        %v1120 = vadd.f32 %v1118, %v1119
        %v1121 = vrot.slane %v1120, 1
        %v1122 = vadd.f32 %v1120, %v1121
        %v1123 = vadd.f32 %v979, %v981
        %v1124 = vadd.f32 %v1123, %v983
        %v1125 = vadd.f32 %v1124, %v985
        %v1126 = vadd.f32 %v1125, %v987
        %v1127 = vadd.f32 %v1126, %v989
        %v1128 = vadd.f32 %v1127, %v991
        %v1129 = vadd.f32 %v1128, %v993
        %v1130 = vrot.slane %v1129, 4
        %v1131 = vadd.f32 %v1129, %v1130
        %v1132 = vrot.slane %v1131, 2
        %v1133 = vadd.f32 %v1131, %v1132
        %v1134 = vrot.slane %v1133, 1
        %v1135 = vadd.f32 %v1133, %v1134
        %v1136 = vadd.f32 %v995, %v997
        %v1137 = vadd.f32 %v1136, %v999
        %v1138 = vadd.f32 %v1137, %v1001
        %v1139 = vadd.f32 %v1138, %v1003
        %v1140 = vadd.f32 %v1139, %v1005
        %v1141 = vadd.f32 %v1140, %v1007
        %v1142 = vadd.f32 %v1141, %v1009
        %v1143 = vrot.slane %v1142, 4
        %v1144 = vadd.f32 %v1142, %v1143
        %v1145 = vrot.slane %v1144, 2
        %v1146 = vadd.f32 %v1144, %v1145
        %v1147 = vrot.slane %v1146, 1
        %v1148 = vadd.f32 %v1146, %v1147
        %v1149 = vadd.f32 %v1011, %v1013
        %v1150 = vadd.f32 %v1149, %v1015
        %v1151 = vadd.f32 %v1150, %v1017
        %v1152 = vadd.f32 %v1151, %v1019
        %v1153 = vadd.f32 %v1152, %v1021
        %v1154 = vadd.f32 %v1153, %v1023
        %v1155 = vadd.f32 %v1154, %v1025
        %v1156 = vrot.slane %v1155, 4
        %v1157 = vadd.f32 %v1155, %v1156
        %v1158 = vrot.slane %v1157, 2
        %v1159 = vadd.f32 %v1157, %v1158
        %v1160 = vrot.slane %v1159, 1
        %v1161 = vadd.f32 %v1159, %v1160
        %v1162 = vadd.f32 %v1027, %v1029
        %v1163 = vadd.f32 %v1162, %v1031
        %v1164 = vadd.f32 %v1163, %v1033
        %v1165 = vadd.f32 %v1164, %v1035
        %v1166 = vadd.f32 %v1165, %v1037
        %v1167 = vadd.f32 %v1166, %v1039
        %v1168 = vadd.f32 %v1167, %v1041
        %v1169 = vrot.slane %v1168, 4
        %v1170 = vadd.f32 %v1168, %v1169
        %v1171 = vrot.slane %v1170, 2
        %v1172 = vadd.f32 %v1170, %v1171
        %v1173 = vrot.slane %v1172, 1
        %v1174 = vadd.f32 %v1172, %v1173
        %v1175 = vadd.f32 %v1043, %v1045
        %v1176 = vadd.f32 %v1175, %v1047
        %v1177 = vadd.f32 %v1176, %v1049
        %v1178 = vadd.f32 %v1177, %v1051
        %v1179 = vadd.f32 %v1178, %v1053
        %v1180 = vadd.f32 %v1179, %v1055
        %v1181 = vadd.f32 %v1180, %v1057
        %v1182 = vrot.slane %v1181, 4
        %v1183 = vadd.f32 %v1181, %v1182
        %v1184 = vrot.slane %v1183, 2
        %v1185 = vadd.f32 %v1183, %v1184
        %v1186 = vrot.slane %v1185, 1
        %v1187 = vadd.f32 %v1185, %v1186
        %v1188 = vmul.f32 %v1070, 0.00012207031
        %v1189 = vmul.f32 %v1083, 0.00012207031
        %v1190 = vmul.f32 %v1096, 0.00012207031
        %v1191 = vmul.f32 %v1109, 0.00012207031
        %v1192 = vmul.f32 %v1122, 0.00012207031
        %v1193 = vmul.f32 %v1135, 0.00012207031
        %v1194 = vmul.f32 %v1148, 0.00012207031
        %v1195 = vmul.f32 %v1161, 0.00012207031
        %v1196 = vmul.f32 %v1174, 0.00012207031
        %v1197 = vmul.f32 %v1187, 0.00012207031
        %v1198 = vadd.f32 %v1188, 1e-05
        %v1199 = vadd.f32 %v1189, 1e-05
        %v1200 = vadd.f32 %v1190, 1e-05
        %v1201 = vadd.f32 %v1191, 1e-05
        %v1202 = vadd.f32 %v1192, 1e-05
        %v1203 = vadd.f32 %v1193, 1e-05
        %v1204 = vadd.f32 %v1194, 1e-05
        %v1205 = vadd.f32 %v1195, 1e-05
        %v1206 = vadd.f32 %v1196, 1e-05
        %v1207 = vadd.f32 %v1197, 1e-05
        %v1208 = vrsqrt.pop %v1198
        %v1209 = vrsqrt.pop %v1199
        %v1210 = vrsqrt.pop %v1200
        %v1211 = vrsqrt.pop %v1201
        %v1212 = vrsqrt.pop %v1202
        %v1213 = vrsqrt.pop %v1203
        %v1214 = vrsqrt.pop %v1204
        %v1215 = vrsqrt.pop %v1205
        %v1216 = vrsqrt.pop %v1206
        %v1217 = vrsqrt.pop %v1207
        %v1218 = vmul.f32 %v738, %v1208
        %v1219 = vmul.f32 %v739, %v1208
        %v1220 = vmul.f32 %v740, %v1208
        %v1221 = vmul.f32 %v741, %v1208
        %v1222 = vmul.f32 %v742, %v1208
        %v1223 = vmul.f32 %v743, %v1208
        %v1224 = vmul.f32 %v744, %v1208
        %v1225 = vmul.f32 %v745, %v1208
        %v1226 = vmul.f32 %v746, %v1209
        %v1227 = vmul.f32 %v747, %v1209
        %v1228 = vmul.f32 %v748, %v1209
        %v1229 = vmul.f32 %v749, %v1209
        %v1230 = vmul.f32 %v750, %v1209
        %v1231 = vmul.f32 %v751, %v1209
        %v1232 = vmul.f32 %v752, %v1209
        %v1233 = vmul.f32 %v753, %v1209
        %v1234 = vmul.f32 %v754, %v1210
        %v1235 = vmul.f32 %v755, %v1210
        %v1236 = vmul.f32 %v756, %v1210
        %v1237 = vmul.f32 %v757, %v1210
        %v1238 = vmul.f32 %v758, %v1210
        %v1239 = vmul.f32 %v759, %v1210
        %v1240 = vmul.f32 %v760, %v1210
        %v1241 = vmul.f32 %v761, %v1210
        %v1242 = vmul.f32 %v762, %v1211
        %v1243 = vmul.f32 %v763, %v1211
        %v1244 = vmul.f32 %v764, %v1211
        %v1245 = vmul.f32 %v765, %v1211
        %v1246 = vmul.f32 %v766, %v1211
        %v1247 = vmul.f32 %v767, %v1211
        %v1248 = vmul.f32 %v768, %v1211
        %v1249 = vmul.f32 %v769, %v1211
        %v1250 = vmul.f32 %v770, %v1212
        %v1251 = vmul.f32 %v771, %v1212
        %v1252 = vmul.f32 %v772, %v1212
        %v1253 = vmul.f32 %v773, %v1212
        %v1254 = vmul.f32 %v774, %v1212
        %v1255 = vmul.f32 %v775, %v1212
        %v1256 = vmul.f32 %v776, %v1212
        %v1257 = vmul.f32 %v777, %v1212
        %v1258 = vmul.f32 %v778, %v1213
        %v1259 = vmul.f32 %v779, %v1213
        %v1260 = vmul.f32 %v780, %v1213
        %v1261 = vmul.f32 %v781, %v1213
        %v1262 = vmul.f32 %v782, %v1213
        %v1263 = vmul.f32 %v783, %v1213
        %v1264 = vmul.f32 %v784, %v1213
        %v1265 = vmul.f32 %v785, %v1213
        %v1266 = vmul.f32 %v786, %v1214
        %v1267 = vmul.f32 %v787, %v1214
        %v1268 = vmul.f32 %v788, %v1214
        %v1269 = vmul.f32 %v789, %v1214
        %v1270 = vmul.f32 %v790, %v1214
        %v1271 = vmul.f32 %v791, %v1214
        %v1272 = vmul.f32 %v792, %v1214
        %v1273 = vmul.f32 %v793, %v1214
        %v1274 = vmul.f32 %v794, %v1215
        %v1275 = vmul.f32 %v795, %v1215
        %v1276 = vmul.f32 %v796, %v1215
        %v1277 = vmul.f32 %v797, %v1215
        %v1278 = vmul.f32 %v798, %v1215
        %v1279 = vmul.f32 %v799, %v1215
        %v1280 = vmul.f32 %v800, %v1215
        %v1281 = vmul.f32 %v801, %v1215
        %v1282 = vmul.f32 %v802, %v1216
        %v1283 = vmul.f32 %v803, %v1216
        %v1284 = vmul.f32 %v804, %v1216
        %v1285 = vmul.f32 %v805, %v1216
        %v1286 = vmul.f32 %v806, %v1216
        %v1287 = vmul.f32 %v807, %v1216
        %v1288 = vmul.f32 %v808, %v1216
        %v1289 = vmul.f32 %v809, %v1216
        %v1290 = vmul.f32 %v810, %v1217
        %v1291 = vmul.f32 %v811, %v1217
        %v1292 = vmul.f32 %v812, %v1217
        %v1293 = vmul.f32 %v813, %v1217
        %v1294 = vmul.f32 %v814, %v1217
        %v1295 = vmul.f32 %v815, %v1217
        %v1296 = vmul.f32 %v816, %v1217
        %v1297 = vmul.f32 %v817, %v1217
        %v1298 = vld [vmem:[#allocation5] sm:$0xff]
        %v1299 = vld [vmem:[#allocation5 + $0x8] sm:$0xff]
        %v1300 = vld [vmem:[#allocation5 + $0x10] sm:$0xff]
        %v1301 = vld [vmem:[#allocation5 + $0x18] sm:$0xff]
        %v1302 = vld [vmem:[#allocation5 + $0x20] sm:$0xff]
        %v1303 = vld [vmem:[#allocation5 + $0x28] sm:$0xff]
        %v1304 = vld [vmem:[#allocation5 + $0x30] sm:$0xff]
        %v1305 = vld [vmem:[#allocation5 + $0x38] sm:$0xff]
        %v1306 = vmul.f32 %v1218, %v1298
        %v1307 = vmul.f32 %v1219, %v1299
        %v1308 = vmul.f32 %v1220, %v1300
        %v1309 = vmul.f32 %v1221, %v1301
        %v1310 = vmul.f32 %v1222, %v1302
        %v1311 = vmul.f32 %v1223, %v1303
        %v1312 = vmul.f32 %v1224, %v1304
        %v1313 = vmul.f32 %v1225, %v1305
        %v1314 = vmul.f32 %v1226, %v1298
        %v1315 = vmul.f32 %v1227, %v1299
        %v1316 = vmul.f32 %v1228, %v1300
        %v1317 = vmul.f32 %v1229, %v1301
        %v1318 = vmul.f32 %v1230, %v1302
        %v1319 = vmul.f32 %v1231, %v1303
        %v1320 = vmul.f32 %v1232, %v1304
        %v1321 = vmul.f32 %v1233, %v1305
        %v1322 = vmul.f32 %v1234, %v1298
        %v1323 = vmul.f32 %v1235, %v1299
        %v1324 = vmul.f32 %v1236, %v1300
        %v1325 = vmul.f32 %v1237, %v1301
        %v1326 = vmul.f32 %v1238, %v1302
        %v1327 = vmul.f32 %v1239, %v1303
        %v1328 = vmul.f32 %v1240, %v1304
        %v1329 = vmul.f32 %v1241, %v1305
        %v1330 = vmul.f32 %v1242, %v1298
        %v1331 = vmul.f32 %v1243, %v1299
        %v1332 = vmul.f32 %v1244, %v1300
        %v1333 = vmul.f32 %v1245, %v1301
        %v1334 = vmul.f32 %v1246, %v1302
        %v1335 = vmul.f32 %v1247, %v1303
        %v1336 = vmul.f32 %v1248, %v1304
        %v1337 = vmul.f32 %v1249, %v1305
        %v1338 = vmul.f32 %v1250, %v1298
        %v1339 = vmul.f32 %v1251, %v1299
        %v1340 = vmul.f32 %v1252, %v1300
        %v1341 = vmul.f32 %v1253, %v1301
        %v1342 = vmul.f32 %v1254, %v1302
        %v1343 = vmul.f32 %v1255, %v1303
        %v1344 = vmul.f32 %v1256, %v1304
        %v1345 = vmul.f32 %v1257, %v1305
        %v1346 = vmul.f32 %v1258, %v1298
        %v1347 = vmul.f32 %v1259, %v1299
        %v1348 = vmul.f32 %v1260, %v1300
        %v1349 = vmul.f32 %v1261, %v1301
        %v1350 = vmul.f32 %v1262, %v1302
        %v1351 = vmul.f32 %v1263, %v1303
        %v1352 = vmul.f32 %v1264, %v1304
        %v1353 = vmul.f32 %v1265, %v1305
        %v1354 = vmul.f32 %v1266, %v1298
        %v1355 = vmul.f32 %v1267, %v1299
        %v1356 = vmul.f32 %v1268, %v1300
        %v1357 = vmul.f32 %v1269, %v1301
        %v1358 = vmul.f32 %v1270, %v1302
        %v1359 = vmul.f32 %v1271, %v1303
        %v1360 = vmul.f32 %v1272, %v1304
        %v1361 = vmul.f32 %v1273, %v1305
        %v1362 = vmul.f32 %v1274, %v1298
        %v1363 = vmul.f32 %v1275, %v1299
        %v1364 = vmul.f32 %v1276, %v1300
        %v1365 = vmul.f32 %v1277, %v1301
        %v1366 = vmul.f32 %v1278, %v1302
        %v1367 = vmul.f32 %v1279, %v1303
        %v1368 = vmul.f32 %v1280, %v1304
        %v1369 = vmul.f32 %v1281, %v1305
        %v1370 = vmul.f32 %v1282, %v1298
        %v1371 = vmul.f32 %v1283, %v1299
        %v1372 = vmul.f32 %v1284, %v1300
        %v1373 = vmul.f32 %v1285, %v1301
        %v1374 = vmul.f32 %v1286, %v1302
        %v1375 = vmul.f32 %v1287, %v1303
        %v1376 = vmul.f32 %v1288, %v1304
        %v1377 = vmul.f32 %v1289, %v1305
        %v1378 = vmul.f32 %v1290, %v1298
        %v1379 = vmul.f32 %v1291, %v1299
        %v1380 = vmul.f32 %v1292, %v1300
        %v1381 = vmul.f32 %v1293, %v1301
        %v1382 = vmul.f32 %v1294, %v1302
        %v1383 = vmul.f32 %v1295, %v1303
        %v1384 = vmul.f32 %v1296, %v1304
        %v1385 = vmul.f32 %v1297, %v1305
        %v1386 = vld [vmem:[#allocation7] sm:$0xff]
        %v1387 = vld [vmem:[#allocation7 + $0x8] sm:$0xff]
        %v1388 = vld [vmem:[#allocation7 + $0x10] sm:$0xff]
        %v1389 = vld [vmem:[#allocation7 + $0x18] sm:$0xff]
        %v1390 = vld [vmem:[#allocation7 + $0x20] sm:$0xff]
        %v1391 = vld [vmem:[#allocation7 + $0x28] sm:$0xff]
        %v1392 = vld [vmem:[#allocation7 + $0x30] sm:$0xff]
        %v1393 = vld [vmem:[#allocation7 + $0x38] sm:$0xff]
        %v1394 = vadd.f32 %v1306, %v1386
        %v1395 = vadd.f32 %v1307, %v1387
        %v1396 = vadd.f32 %v1308, %v1388
        %v1397 = vadd.f32 %v1309, %v1389
        %v1398 = vadd.f32 %v1310, %v1390
        %v1399 = vadd.f32 %v1311, %v1391
        %v1400 = vadd.f32 %v1312, %v1392
        %v1401 = vadd.f32 %v1313, %v1393
        %v1402 = vadd.f32 %v1314, %v1386
        %v1403 = vadd.f32 %v1315, %v1387
        %v1404 = vadd.f32 %v1316, %v1388
        %v1405 = vadd.f32 %v1317, %v1389
        %v1406 = vadd.f32 %v1318, %v1390
        %v1407 = vadd.f32 %v1319, %v1391
        %v1408 = vadd.f32 %v1320, %v1392
        %v1409 = vadd.f32 %v1321, %v1393
        %v1410 = vadd.f32 %v1322, %v1386
        %v1411 = vadd.f32 %v1323, %v1387
        %v1412 = vadd.f32 %v1324, %v1388
        %v1413 = vadd.f32 %v1325, %v1389
        %v1414 = vadd.f32 %v1326, %v1390
        %v1415 = vadd.f32 %v1327, %v1391
        %v1416 = vadd.f32 %v1328, %v1392
        %v1417 = vadd.f32 %v1329, %v1393
        %v1418 = vadd.f32 %v1330, %v1386
        %v1419 = vadd.f32 %v1331, %v1387
        %v1420 = vadd.f32 %v1332, %v1388
        %v1421 = vadd.f32 %v1333, %v1389
        %v1422 = vadd.f32 %v1334, %v1390
        %v1423 = vadd.f32 %v1335, %v1391
        %v1424 = vadd.f32 %v1336, %v1392
        %v1425 = vadd.f32 %v1337, %v1393
        %v1426 = vadd.f32 %v1338, %v1386
        %v1427 = vadd.f32 %v1339, %v1387
        %v1428 = vadd.f32 %v1340, %v1388
        %v1429 = vadd.f32 %v1341, %v1389
        %v1430 = vadd.f32 %v1342, %v1390
        %v1431 = vadd.f32 %v1343, %v1391
        %v1432 = vadd.f32 %v1344, %v1392
        %v1433 = vadd.f32 %v1345, %v1393
        %v1434 = vadd.f32 %v1346, %v1386
        %v1435 = vadd.f32 %v1347, %v1387
        %v1436 = vadd.f32 %v1348, %v1388
        %v1437 = vadd.f32 %v1349, %v1389
        %v1438 = vadd.f32 %v1350, %v1390
        %v1439 = vadd.f32 %v1351, %v1391
        %v1440 = vadd.f32 %v1352, %v1392
        %v1441 = vadd.f32 %v1353, %v1393
        %v1442 = vadd.f32 %v1354, %v1386
        %v1443 = vadd.f32 %v1355, %v1387
        %v1444 = vadd.f32 %v1356, %v1388
        %v1445 = vadd.f32 %v1357, %v1389
        %v1446 = vadd.f32 %v1358, %v1390
        %v1447 = vadd.f32 %v1359, %v1391
        %v1448 = vadd.f32 %v1360, %v1392
        %v1449 = vadd.f32 %v1361, %v1393
        %v1450 = vadd.f32 %v1362, %v1386
        %v1451 = vadd.f32 %v1363, %v1387
        %v1452 = vadd.f32 %v1364, %v1388
        %v1453 = vadd.f32 %v1365, %v1389
        %v1454 = vadd.f32 %v1366, %v1390
        %v1455 = vadd.f32 %v1367, %v1391
        %v1456 = vadd.f32 %v1368, %v1392
        %v1457 = vadd.f32 %v1369, %v1393
        %v1458 = vadd.f32 %v1370, %v1386
        %v1459 = vadd.f32 %v1371, %v1387
        %v1460 = vadd.f32 %v1372, %v1388
        %v1461 = vadd.f32 %v1373, %v1389
        %v1462 = vadd.f32 %v1374, %v1390
        %v1463 = vadd.f32 %v1375, %v1391
        %v1464 = vadd.f32 %v1376, %v1392
        %v1465 = vadd.f32 %v1377, %v1393
        %v1466 = vadd.f32 %v1378, %v1386
        %v1467 = vadd.f32 %v1379, %v1387
        %v1468 = vadd.f32 %v1380, %v1388
        %v1469 = vadd.f32 %v1381, %v1389
        %v1470 = vadd.f32 %v1382, %v1390
        %v1471 = vadd.f32 %v1383, %v1391
        %v1472 = vadd.f32 %v1384, %v1392
        %v1473 = vadd.f32 %v1385, %v1393
        %v1474 = vld [vmem:[#allocation8] sm:$0xff]
        %v1475 = vld [vmem:[#allocation8 + $0x8] sm:$0xff]
        %v1476 = vld [vmem:[#allocation8 + $0x10] sm:$0xff]
        %v1477 = vld [vmem:[#allocation8 + $0x18] sm:$0xff]
        %v1478 = vld [vmem:[#allocation8 + $0x20] sm:$0xff]
        %v1479 = vld [vmem:[#allocation8 + $0x28] sm:$0xff]
        %v1480 = vld [vmem:[#allocation8 + $0x30] sm:$0xff]
        %v1481 = vld [vmem:[#allocation8 + $0x38] sm:$0xff]
        %v1482 = vld [vmem:[#allocation8 + $0x40] sm:$0xff]
        %v1483 = vld [vmem:[#allocation8 + $0x48] sm:$0xff]
        %v1484 = vld [vmem:[#allocation8 + $0x50] sm:$0xff]
        %v1485 = vld [vmem:[#allocation8 + $0x58] sm:$0xff]
        %v1486 = vld [vmem:[#allocation8 + $0x60] sm:$0xff]
        %v1487 = vld [vmem:[#allocation8 + $0x68] sm:$0xff]
        %v1488 = vld [vmem:[#allocation8 + $0x70] sm:$0xff]
        %v1489 = vld [vmem:[#allocation8 + $0x78] sm:$0xff]
        %v1490 = vld [vmem:[#allocation8 + $0x80] sm:$0xff]
        %v1491 = vld [vmem:[#allocation8 + $0x88] sm:$0xff]
        %v1492 = vld [vmem:[#allocation8 + $0x90] sm:$0xff]
        %v1493 = vld [vmem:[#allocation8 + $0x98] sm:$0xff]
        %v1494 = vld [vmem:[#allocation8 + $0xa0] sm:$0xff]
        %v1495 = vld [vmem:[#allocation8 + $0xa8] sm:$0xff]
        %v1496 = vld [vmem:[#allocation8 + $0xb0] sm:$0xff]
        %v1497 = vld [vmem:[#allocation8 + $0xb8] sm:$0xff]
        %v1498 = vld [vmem:[#allocation8 + $0xc0] sm:$0xff]
        %v1499 = vld [vmem:[#allocation8 + $0xc8] sm:$0xff]
        %v1500 = vld [vmem:[#allocation8 + $0xd0] sm:$0xff]
        %v1501 = vld [vmem:[#allocation8 + $0xd8] sm:$0xff]
        %v1502 = vld [vmem:[#allocation8 + $0xe0] sm:$0xff]
        %v1503 = vld [vmem:[#allocation8 + $0xe8] sm:$0xff]
        %v1504 = vld [vmem:[#allocation8 + $0xf0] sm:$0xff]
        %v1505 = vld [vmem:[#allocation8 + $0xf8] sm:$0xff]
        %v1506 = vld [vmem:[%s4] sm:$0x3]
        %v1508 = vlaneseq
        %v1509 = vshrl.u32 %v1508, 7
        %v1510 = vsub.s32 0, %v1509
        %v1511 = vrot.slane %v1506, %v1510
        %v1512 = vlaneseq
        %v1513 = vshrl.u32 %v1512, 7
        %v1514 = vsub.s32 1, %v1513
        %v1515 = vrot.slane %v1506, %v1514
        %1518 = vmatprep.subr.mxu0 %v1505
        %1519 = vmatpush1.msra.mxu0 %v1504
        %1520 = vmatprep.subr.mxu0 %v1503
        %1521 = vmatpush1.msra.mxu0 %v1502
        %1522 = vmatprep.subr.mxu0 %v1501
        %1523 = vmatpush1.msra.mxu0 %v1500
        %1524 = vmatprep.subr.mxu0 %v1499
        %1525 = vmatpush1.msra.mxu0 %v1498
        %1526 = vmatprep.subr.mxu0 %v1497
        %1527 = vmatpush1.msra.mxu0 %v1496
        %1528 = vmatprep.subr.mxu0 %v1495
        %1529 = vmatpush1.msra.mxu0 %v1494
        %1530 = vmatprep.subr.mxu0 %v1493
        %1531 = vmatpush1.msra.mxu0 %v1492
        %1532 = vmatprep.subr.mxu0 %v1491
        %1533 = vmatpush1.msra.mxu0 %v1490
        %1534 = vmatprep.subr.mxu0 %v1489
        %1535 = vmatpush1.msra.mxu0 %v1488
        %1536 = vmatprep.subr.mxu0 %v1487
        %1537 = vmatpush1.msra.mxu0 %v1486
        %1538 = vmatprep.subr.mxu0 %v1485
        %1539 = vmatpush1.msra.mxu0 %v1484
        %1540 = vmatprep.subr.mxu0 %v1483
        %1541 = vmatpush1.msra.mxu0 %v1482
        %1542 = vmatprep.subr.mxu0 %v1481
        %1543 = vmatpush1.msra.mxu0 %v1480
        %1544 = vmatprep.subr.mxu0 %v1479
        %1545 = vmatpush1.msra.mxu0 %v1478
        %1546 = vmatprep.subr.mxu0 %v1477
        %1547 = vmatpush1.msra.mxu0 %v1476
        %1548 = vmatprep.subr.mxu0 %v1475
        %1549 = vmatpush1.msra.mxu0 %v1474
        %1550 = vmatprep.subr.mxu0 0.0
        %1551 = vmatpush2.msra.mxu0 0.0
        %1552 = vmatprep.subr.mxu0 0.0
        %1553 = vmatpush2.msra.mxu0 0.0
        %1554 = vmatprep.subr.mxu0 0.0
        %1555 = vmatpush2.msra.mxu0 0.0
        %1556 = vmatprep.subr.mxu0 0.0
        %1557 = vmatpush2.msra.mxu0 0.0
        %1558 = vmatprep.subr.mxu0 0.0
        %1559 = vmatpush2.msra.mxu0 0.0
        %1560 = vmatprep.subr.mxu0 0.0
        %1561 = vmatpush2.msra.mxu0 0.0
        %1562 = vmatprep.subr.mxu0 0.0
        %1563 = vmatpush2.msra.mxu0 0.0
        %1564 = vmatprep.subr.mxu0 0.0
        %1565 = vmatpush2.msra.mxu0 0.0
        %1566 = vmatprep.subr.mxu0 0.0
        %1567 = vmatpush2.msra.mxu0 0.0
        %1568 = vmatprep.subr.mxu0 0.0
        %1569 = vmatpush2.msra.mxu0 0.0
        %1570 = vmatprep.subr.mxu0 0.0
        %1571 = vmatpush2.msra.mxu0 0.0
        %1572 = vmatprep.subr.mxu0 0.0
        %1573 = vmatpush2.msra.mxu0 0.0
        %1574 = vmatprep.subr.mxu0 0.0
        %1575 = vmatpush2.msra.mxu0 0.0
        %1576 = vmatprep.subr.mxu0 0.0
        %1577 = vmatpush2.msra.mxu0 0.0
        %1578 = vmatprep.subr.mxu0 0.0
        %1579 = vmatpush2.msra.mxu0 0.0
        %1580 = vmatprep.subr.mxu0 0.0
        %1581 = vmatpush2.msra.mxu0 0.0
        %1582 = vmatprep.mubr.f32.mxu0 0.0
        %1583 = vmatmul.mubr.f32.gmra.mxu0 %v1394
        %v1584 = vpop.f32.mrf.mxu0
        %v1585 = vadd.f32 %v1511, %v1584
        %v1586 = vpop.f32.mrf.mxu0
        %v1587 = vadd.f32 %v1515, %v1586
        %1588 = vmatprep.mubr.f32.mxu0 0.0
        %1589 = vmatmul.mubr.f32.gmra.mxu0 %v1395
        %v1590 = vpop.f32.mrf.mxu0
        %v1591 = vadd.f32 %v1511, %v1590
        %v1592 = vpop.f32.mrf.mxu0
        %v1593 = vadd.f32 %v1515, %v1592
        %1594 = vmatprep.mubr.f32.mxu0 0.0
        %1595 = vmatmul.mubr.f32.gmra.mxu0 %v1396
        %v1596 = vpop.f32.mrf.mxu0
        %v1597 = vadd.f32 %v1511, %v1596
        %v1598 = vpop.f32.mrf.mxu0
        %v1599 = vadd.f32 %v1515, %v1598
        %1600 = vmatprep.mubr.f32.mxu0 0.0
        %1601 = vmatmul.mubr.f32.gmra.mxu0 %v1397
        %v1602 = vpop.f32.mrf.mxu0
        %v1603 = vadd.f32 %v1511, %v1602
        %v1604 = vpop.f32.mrf.mxu0
        %v1605 = vadd.f32 %v1515, %v1604
        %1606 = vmatprep.mubr.f32.mxu0 0.0
        %1607 = vmatmul.mubr.f32.gmra.mxu0 %v1398
        %v1608 = vpop.f32.mrf.mxu0
        %v1609 = vadd.f32 %v1511, %v1608
        %v1610 = vpop.f32.mrf.mxu0
        %v1611 = vadd.f32 %v1515, %v1610
        %1612 = vmatprep.mubr.f32.mxu0 0.0
        %1613 = vmatmul.mubr.f32.gmra.mxu0 %v1399
        %v1614 = vpop.f32.mrf.mxu0
        %v1615 = vadd.f32 %v1511, %v1614
        %v1616 = vpop.f32.mrf.mxu0
        %v1617 = vadd.f32 %v1515, %v1616
        %1618 = vmatprep.mubr.f32.mxu0 0.0
        %1619 = vmatmul.mubr.f32.gmra.mxu0 %v1400
        %v1620 = vpop.f32.mrf.mxu0
        %v1621 = vadd.f32 %v1511, %v1620
        %v1622 = vpop.f32.mrf.mxu0
        %v1623 = vadd.f32 %v1515, %v1622
        %1624 = vmatprep.mubr.f32.mxu0 0.0
        %1625 = vmatmul.mubr.f32.gmra.mxu0 %v1401
        %v1626 = vpop.f32.mrf.mxu0
        %v1627 = vadd.f32 %v1511, %v1626
        %v1628 = vpop.f32.mrf.mxu0
        %v1629 = vadd.f32 %v1515, %v1628
        %1630 = vmatprep.mubr.f32.mxu0 0.0
        %1631 = vmatmul.mubr.f32.gmra.mxu0 %v1402
        %v1632 = vpop.f32.mrf.mxu0
        %v1633 = vadd.f32 %v1511, %v1632
        %v1634 = vpop.f32.mrf.mxu0
        %v1635 = vadd.f32 %v1515, %v1634
        %1636 = vmatprep.mubr.f32.mxu0 0.0
        %1637 = vmatmul.mubr.f32.gmra.mxu0 %v1403
        %v1638 = vpop.f32.mrf.mxu0
        %v1639 = vadd.f32 %v1511, %v1638
        %v1640 = vpop.f32.mrf.mxu0
        %v1641 = vadd.f32 %v1515, %v1640
        %1642 = vmatprep.mubr.f32.mxu0 0.0
        %1643 = vmatmul.mubr.f32.gmra.mxu0 %v1404
        %v1644 = vpop.f32.mrf.mxu0
        %v1645 = vadd.f32 %v1511, %v1644
        %v1646 = vpop.f32.mrf.mxu0
        %v1647 = vadd.f32 %v1515, %v1646
        %1648 = vmatprep.mubr.f32.mxu0 0.0
        %1649 = vmatmul.mubr.f32.gmra.mxu0 %v1405
        %v1650 = vpop.f32.mrf.mxu0
        %v1651 = vadd.f32 %v1511, %v1650
        %v1652 = vpop.f32.mrf.mxu0
        %v1653 = vadd.f32 %v1515, %v1652
        %1654 = vmatprep.mubr.f32.mxu0 0.0
        %1655 = vmatmul.mubr.f32.gmra.mxu0 %v1406
        %v1656 = vpop.f32.mrf.mxu0
        %v1657 = vadd.f32 %v1511, %v1656
        %v1658 = vpop.f32.mrf.mxu0
        %v1659 = vadd.f32 %v1515, %v1658
        %1660 = vmatprep.mubr.f32.mxu0 0.0
        %1661 = vmatmul.mubr.f32.gmra.mxu0 %v1407
        %v1662 = vpop.f32.mrf.mxu0
        %v1663 = vadd.f32 %v1511, %v1662
        %v1664 = vpop.f32.mrf.mxu0
        %v1665 = vadd.f32 %v1515, %v1664
        %1666 = vmatprep.mubr.f32.mxu0 0.0
        %1667 = vmatmul.mubr.f32.gmra.mxu0 %v1408
        %v1668 = vpop.f32.mrf.mxu0
        %v1669 = vadd.f32 %v1511, %v1668
        %v1670 = vpop.f32.mrf.mxu0
        %v1671 = vadd.f32 %v1515, %v1670
        %1672 = vmatprep.mubr.f32.mxu0 0.0
        %1673 = vmatmul.mubr.f32.gmra.mxu0 %v1409
        %v1674 = vpop.f32.mrf.mxu0
        %v1675 = vadd.f32 %v1511, %v1674
        %v1676 = vpop.f32.mrf.mxu0
        %v1677 = vadd.f32 %v1515, %v1676
        %1678 = vmatprep.mubr.f32.mxu0 0.0
        %1679 = vmatmul.mubr.f32.gmra.mxu0 %v1410
        %v1680 = vpop.f32.mrf.mxu0
        %v1681 = vadd.f32 %v1511, %v1680
        %v1682 = vpop.f32.mrf.mxu0
        %v1683 = vadd.f32 %v1515, %v1682
        %1684 = vmatprep.mubr.f32.mxu0 0.0
        %1685 = vmatmul.mubr.f32.gmra.mxu0 %v1411
        %v1686 = vpop.f32.mrf.mxu0
        %v1687 = vadd.f32 %v1511, %v1686
        %v1688 = vpop.f32.mrf.mxu0
        %v1689 = vadd.f32 %v1515, %v1688
        %1690 = vmatprep.mubr.f32.mxu0 0.0
        %1691 = vmatmul.mubr.f32.gmra.mxu0 %v1412
        %v1692 = vpop.f32.mrf.mxu0
        %v1693 = vadd.f32 %v1511, %v1692
        %v1694 = vpop.f32.mrf.mxu0
        %v1695 = vadd.f32 %v1515, %v1694
        %1696 = vmatprep.mubr.f32.mxu0 0.0
        %1697 = vmatmul.mubr.f32.gmra.mxu0 %v1413
        %v1698 = vpop.f32.mrf.mxu0
        %v1699 = vadd.f32 %v1511, %v1698
        %v1700 = vpop.f32.mrf.mxu0
        %v1701 = vadd.f32 %v1515, %v1700
        %1702 = vmatprep.mubr.f32.mxu0 0.0
        %1703 = vmatmul.mubr.f32.gmra.mxu0 %v1414
        %v1704 = vpop.f32.mrf.mxu0
        %v1705 = vadd.f32 %v1511, %v1704
        %v1706 = vpop.f32.mrf.mxu0
        %v1707 = vadd.f32 %v1515, %v1706
        %1708 = vmatprep.mubr.f32.mxu0 0.0
        %1709 = vmatmul.mubr.f32.gmra.mxu0 %v1415
        %v1710 = vpop.f32.mrf.mxu0
        %v1711 = vadd.f32 %v1511, %v1710
        %v1712 = vpop.f32.mrf.mxu0
        %v1713 = vadd.f32 %v1515, %v1712
        %1714 = vmatprep.mubr.f32.mxu0 0.0
        %1715 = vmatmul.mubr.f32.gmra.mxu0 %v1416
        %v1716 = vpop.f32.mrf.mxu0
        %v1717 = vadd.f32 %v1511, %v1716
        %v1718 = vpop.f32.mrf.mxu0
        %v1719 = vadd.f32 %v1515, %v1718
        %1720 = vmatprep.mubr.f32.mxu0 0.0
        %1721 = vmatmul.mubr.f32.gmra.mxu0 %v1417
        %v1722 = vpop.f32.mrf.mxu0
        %v1723 = vadd.f32 %v1511, %v1722
        %v1724 = vpop.f32.mrf.mxu0
        %v1725 = vadd.f32 %v1515, %v1724
        %1726 = vmatprep.mubr.f32.mxu0 0.0
        %1727 = vmatmul.mubr.f32.gmra.mxu0 %v1418
        %v1728 = vpop.f32.mrf.mxu0
        %v1729 = vadd.f32 %v1511, %v1728
        %v1730 = vpop.f32.mrf.mxu0
        %v1731 = vadd.f32 %v1515, %v1730
        %1732 = vmatprep.mubr.f32.mxu0 0.0
        %1733 = vmatmul.mubr.f32.gmra.mxu0 %v1419
        %v1734 = vpop.f32.mrf.mxu0
        %v1735 = vadd.f32 %v1511, %v1734
        %v1736 = vpop.f32.mrf.mxu0
        %v1737 = vadd.f32 %v1515, %v1736
        %1738 = vmatprep.mubr.f32.mxu0 0.0
        %1739 = vmatmul.mubr.f32.gmra.mxu0 %v1420
        %v1740 = vpop.f32.mrf.mxu0
        %v1741 = vadd.f32 %v1511, %v1740
        %v1742 = vpop.f32.mrf.mxu0
        %v1743 = vadd.f32 %v1515, %v1742
        %1744 = vmatprep.mubr.f32.mxu0 0.0
        %1745 = vmatmul.mubr.f32.gmra.mxu0 %v1421
        %v1746 = vpop.f32.mrf.mxu0
        %v1747 = vadd.f32 %v1511, %v1746
        %v1748 = vpop.f32.mrf.mxu0
        %v1749 = vadd.f32 %v1515, %v1748
        %1750 = vmatprep.mubr.f32.mxu0 0.0
        %1751 = vmatmul.mubr.f32.gmra.mxu0 %v1422
        %v1752 = vpop.f32.mrf.mxu0
        %v1753 = vadd.f32 %v1511, %v1752
        %v1754 = vpop.f32.mrf.mxu0
        %v1755 = vadd.f32 %v1515, %v1754
        %1756 = vmatprep.mubr.f32.mxu0 0.0
        %1757 = vmatmul.mubr.f32.gmra.mxu0 %v1423
        %v1758 = vpop.f32.mrf.mxu0
        %v1759 = vadd.f32 %v1511, %v1758
        %v1760 = vpop.f32.mrf.mxu0
        %v1761 = vadd.f32 %v1515, %v1760
        %1762 = vmatprep.mubr.f32.mxu0 0.0
        %1763 = vmatmul.mubr.f32.gmra.mxu0 %v1424
        %v1764 = vpop.f32.mrf.mxu0
        %v1765 = vadd.f32 %v1511, %v1764
        %v1766 = vpop.f32.mrf.mxu0
        %v1767 = vadd.f32 %v1515, %v1766
        %1768 = vmatprep.mubr.f32.mxu0 0.0
        %1769 = vmatmul.mubr.f32.gmra.mxu0 %v1425
        %v1770 = vpop.f32.mrf.mxu0
        %v1771 = vadd.f32 %v1511, %v1770
        %v1772 = vpop.f32.mrf.mxu0
        %v1773 = vadd.f32 %v1515, %v1772
        %1774 = vmatprep.mubr.f32.mxu0 0.0
        %1775 = vmatmul.mubr.f32.gmra.mxu0 %v1426
        %v1776 = vpop.f32.mrf.mxu0
        %v1777 = vadd.f32 %v1511, %v1776
        %v1778 = vpop.f32.mrf.mxu0
        %v1779 = vadd.f32 %v1515, %v1778
        %1780 = vmatprep.mubr.f32.mxu0 0.0
        %1781 = vmatmul.mubr.f32.gmra.mxu0 %v1427
        %v1782 = vpop.f32.mrf.mxu0
        %v1783 = vadd.f32 %v1511, %v1782
        %v1784 = vpop.f32.mrf.mxu0
        %v1785 = vadd.f32 %v1515, %v1784
        %1786 = vmatprep.mubr.f32.mxu0 0.0
        %1787 = vmatmul.mubr.f32.gmra.mxu0 %v1428
        %v1788 = vpop.f32.mrf.mxu0
        %v1789 = vadd.f32 %v1511, %v1788
        %v1790 = vpop.f32.mrf.mxu0
        %v1791 = vadd.f32 %v1515, %v1790
        %1792 = vmatprep.mubr.f32.mxu0 0.0
        %1793 = vmatmul.mubr.f32.gmra.mxu0 %v1429
        %v1794 = vpop.f32.mrf.mxu0
        %v1795 = vadd.f32 %v1511, %v1794
        %v1796 = vpop.f32.mrf.mxu0
        %v1797 = vadd.f32 %v1515, %v1796
        %1798 = vmatprep.mubr.f32.mxu0 0.0
        %1799 = vmatmul.mubr.f32.gmra.mxu0 %v1430
        %v1800 = vpop.f32.mrf.mxu0
        %v1801 = vadd.f32 %v1511, %v1800
        %v1802 = vpop.f32.mrf.mxu0
        %v1803 = vadd.f32 %v1515, %v1802
        %1804 = vmatprep.mubr.f32.mxu0 0.0
        %1805 = vmatmul.mubr.f32.gmra.mxu0 %v1431
        %v1806 = vpop.f32.mrf.mxu0
        %v1807 = vadd.f32 %v1511, %v1806
        %v1808 = vpop.f32.mrf.mxu0
        %v1809 = vadd.f32 %v1515, %v1808
        %1810 = vmatprep.mubr.f32.mxu0 0.0
        %1811 = vmatmul.mubr.f32.gmra.mxu0 %v1432
        %v1812 = vpop.f32.mrf.mxu0
        %v1813 = vadd.f32 %v1511, %v1812
        %v1814 = vpop.f32.mrf.mxu0
        %v1815 = vadd.f32 %v1515, %v1814
        %1816 = vmatprep.mubr.f32.mxu0 0.0
        %1817 = vmatmul.mubr.f32.gmra.mxu0 %v1433
        %v1818 = vpop.f32.mrf.mxu0
        %v1819 = vadd.f32 %v1511, %v1818
        %v1820 = vpop.f32.mrf.mxu0
        %v1821 = vadd.f32 %v1515, %v1820
        %1822 = vmatprep.mubr.f32.mxu0 0.0
        %1823 = vmatmul.mubr.f32.gmra.mxu0 %v1434
        %v1824 = vpop.f32.mrf.mxu0
        %v1825 = vadd.f32 %v1511, %v1824
        %v1826 = vpop.f32.mrf.mxu0
        %v1827 = vadd.f32 %v1515, %v1826
        %1828 = vmatprep.mubr.f32.mxu0 0.0
        %1829 = vmatmul.mubr.f32.gmra.mxu0 %v1435
        %v1830 = vpop.f32.mrf.mxu0
        %v1831 = vadd.f32 %v1511, %v1830
        %v1832 = vpop.f32.mrf.mxu0
        %v1833 = vadd.f32 %v1515, %v1832
        %1834 = vmatprep.mubr.f32.mxu0 0.0
        %1835 = vmatmul.mubr.f32.gmra.mxu0 %v1436
        %v1836 = vpop.f32.mrf.mxu0
        %v1837 = vadd.f32 %v1511, %v1836
        %v1838 = vpop.f32.mrf.mxu0
        %v1839 = vadd.f32 %v1515, %v1838
        %1840 = vmatprep.mubr.f32.mxu0 0.0
        %1841 = vmatmul.mubr.f32.gmra.mxu0 %v1437
        %v1842 = vpop.f32.mrf.mxu0
        %v1843 = vadd.f32 %v1511, %v1842
        %v1844 = vpop.f32.mrf.mxu0
        %v1845 = vadd.f32 %v1515, %v1844
        %1846 = vmatprep.mubr.f32.mxu0 0.0
        %1847 = vmatmul.mubr.f32.gmra.mxu0 %v1438
        %v1848 = vpop.f32.mrf.mxu0
        %v1849 = vadd.f32 %v1511, %v1848
        %v1850 = vpop.f32.mrf.mxu0
        %v1851 = vadd.f32 %v1515, %v1850
        %1852 = vmatprep.mubr.f32.mxu0 0.0
        %1853 = vmatmul.mubr.f32.gmra.mxu0 %v1439
        %v1854 = vpop.f32.mrf.mxu0
        %v1855 = vadd.f32 %v1511, %v1854
        %v1856 = vpop.f32.mrf.mxu0
        %v1857 = vadd.f32 %v1515, %v1856
        %1858 = vmatprep.mubr.f32.mxu0 0.0
        %1859 = vmatmul.mubr.f32.gmra.mxu0 %v1440
        %v1860 = vpop.f32.mrf.mxu0
        %v1861 = vadd.f32 %v1511, %v1860
        %v1862 = vpop.f32.mrf.mxu0
        %v1863 = vadd.f32 %v1515, %v1862
        %1864 = vmatprep.mubr.f32.mxu0 0.0
        %1865 = vmatmul.mubr.f32.gmra.mxu0 %v1441
        %v1866 = vpop.f32.mrf.mxu0
        %v1867 = vadd.f32 %v1511, %v1866
        %v1868 = vpop.f32.mrf.mxu0
        %v1869 = vadd.f32 %v1515, %v1868
        %1870 = vmatprep.mubr.f32.mxu0 0.0
        %1871 = vmatmul.mubr.f32.gmra.mxu0 %v1442
        %v1872 = vpop.f32.mrf.mxu0
        %v1873 = vadd.f32 %v1511, %v1872
        %v1874 = vpop.f32.mrf.mxu0
        %v1875 = vadd.f32 %v1515, %v1874
        %1876 = vmatprep.mubr.f32.mxu0 0.0
        %1877 = vmatmul.mubr.f32.gmra.mxu0 %v1443
        %v1878 = vpop.f32.mrf.mxu0
        %v1879 = vadd.f32 %v1511, %v1878
        %v1880 = vpop.f32.mrf.mxu0
        %v1881 = vadd.f32 %v1515, %v1880
        %1882 = vmatprep.mubr.f32.mxu0 0.0
        %1883 = vmatmul.mubr.f32.gmra.mxu0 %v1444
        %v1884 = vpop.f32.mrf.mxu0
        %v1885 = vadd.f32 %v1511, %v1884
        %v1886 = vpop.f32.mrf.mxu0
        %v1887 = vadd.f32 %v1515, %v1886
        %1888 = vmatprep.mubr.f32.mxu0 0.0
        %1889 = vmatmul.mubr.f32.gmra.mxu0 %v1445
        %v1890 = vpop.f32.mrf.mxu0
        %v1891 = vadd.f32 %v1511, %v1890
        %v1892 = vpop.f32.mrf.mxu0
        %v1893 = vadd.f32 %v1515, %v1892
        %1894 = vmatprep.mubr.f32.mxu0 0.0
        %1895 = vmatmul.mubr.f32.gmra.mxu0 %v1446
        %v1896 = vpop.f32.mrf.mxu0
        %v1897 = vadd.f32 %v1511, %v1896
        %v1898 = vpop.f32.mrf.mxu0
        %v1899 = vadd.f32 %v1515, %v1898
        %1900 = vmatprep.mubr.f32.mxu0 0.0
        %1901 = vmatmul.mubr.f32.gmra.mxu0 %v1447
        %v1902 = vpop.f32.mrf.mxu0
        %v1903 = vadd.f32 %v1511, %v1902
        %v1904 = vpop.f32.mrf.mxu0
        %v1905 = vadd.f32 %v1515, %v1904
        %1906 = vmatprep.mubr.f32.mxu0 0.0
        %1907 = vmatmul.mubr.f32.gmra.mxu0 %v1448
        %v1908 = vpop.f32.mrf.mxu0
        %v1909 = vadd.f32 %v1511, %v1908
        %v1910 = vpop.f32.mrf.mxu0
        %v1911 = vadd.f32 %v1515, %v1910
        %1912 = vmatprep.mubr.f32.mxu0 0.0
        %1913 = vmatmul.mubr.f32.gmra.mxu0 %v1449
        %v1914 = vpop.f32.mrf.mxu0
        %v1915 = vadd.f32 %v1511, %v1914
        %v1916 = vpop.f32.mrf.mxu0
        %v1917 = vadd.f32 %v1515, %v1916
        %1918 = vmatprep.mubr.f32.mxu0 0.0
        %1919 = vmatmul.mubr.f32.gmra.mxu0 %v1450
        %v1920 = vpop.f32.mrf.mxu0
        %v1921 = vadd.f32 %v1511, %v1920
        %v1922 = vpop.f32.mrf.mxu0
        %v1923 = vadd.f32 %v1515, %v1922
        %1924 = vmatprep.mubr.f32.mxu0 0.0
        %1925 = vmatmul.mubr.f32.gmra.mxu0 %v1451
        %v1926 = vpop.f32.mrf.mxu0
        %v1927 = vadd.f32 %v1511, %v1926
        %v1928 = vpop.f32.mrf.mxu0
        %v1929 = vadd.f32 %v1515, %v1928
        %1930 = vmatprep.mubr.f32.mxu0 0.0
        %1931 = vmatmul.mubr.f32.gmra.mxu0 %v1452
        %v1932 = vpop.f32.mrf.mxu0
        %v1933 = vadd.f32 %v1511, %v1932
        %v1934 = vpop.f32.mrf.mxu0
        %v1935 = vadd.f32 %v1515, %v1934
        %1936 = vmatprep.mubr.f32.mxu0 0.0
        %1937 = vmatmul.mubr.f32.gmra.mxu0 %v1453
        %v1938 = vpop.f32.mrf.mxu0
        %v1939 = vadd.f32 %v1511, %v1938
        %v1940 = vpop.f32.mrf.mxu0
        %v1941 = vadd.f32 %v1515, %v1940
        %1942 = vmatprep.mubr.f32.mxu0 0.0
        %1943 = vmatmul.mubr.f32.gmra.mxu0 %v1454
        %v1944 = vpop.f32.mrf.mxu0
        %v1945 = vadd.f32 %v1511, %v1944
        %v1946 = vpop.f32.mrf.mxu0
        %v1947 = vadd.f32 %v1515, %v1946
        %1948 = vmatprep.mubr.f32.mxu0 0.0
        %1949 = vmatmul.mubr.f32.gmra.mxu0 %v1455
        %v1950 = vpop.f32.mrf.mxu0
        %v1951 = vadd.f32 %v1511, %v1950
        %v1952 = vpop.f32.mrf.mxu0
        %v1953 = vadd.f32 %v1515, %v1952
        %1954 = vmatprep.mubr.f32.mxu0 0.0
        %1955 = vmatmul.mubr.f32.gmra.mxu0 %v1456
        %v1956 = vpop.f32.mrf.mxu0
        %v1957 = vadd.f32 %v1511, %v1956
        %v1958 = vpop.f32.mrf.mxu0
        %v1959 = vadd.f32 %v1515, %v1958
        %1960 = vmatprep.mubr.f32.mxu0 0.0
        %1961 = vmatmul.mubr.f32.gmra.mxu0 %v1457
        %v1962 = vpop.f32.mrf.mxu0
        %v1963 = vadd.f32 %v1511, %v1962
        %v1964 = vpop.f32.mrf.mxu0
        %v1965 = vadd.f32 %v1515, %v1964
        %1966 = vmatprep.mubr.f32.mxu0 0.0
        %1967 = vmatmul.mubr.f32.gmra.mxu0 %v1458
        %v1968 = vpop.f32.mrf.mxu0
        %v1969 = vadd.f32 %v1511, %v1968
        %v1970 = vpop.f32.mrf.mxu0
        %v1971 = vadd.f32 %v1515, %v1970
        %1972 = vmatprep.mubr.f32.mxu0 0.0
        %1973 = vmatmul.mubr.f32.gmra.mxu0 %v1459
        %v1974 = vpop.f32.mrf.mxu0
        %v1975 = vadd.f32 %v1511, %v1974
        %v1976 = vpop.f32.mrf.mxu0
        %v1977 = vadd.f32 %v1515, %v1976
        %1978 = vmatprep.mubr.f32.mxu0 0.0
        %1979 = vmatmul.mubr.f32.gmra.mxu0 %v1460
        %v1980 = vpop.f32.mrf.mxu0
        %v1981 = vadd.f32 %v1511, %v1980
        %v1982 = vpop.f32.mrf.mxu0
        %v1983 = vadd.f32 %v1515, %v1982
        %1984 = vmatprep.mubr.f32.mxu0 0.0
        %1985 = vmatmul.mubr.f32.gmra.mxu0 %v1461
        %v1986 = vpop.f32.mrf.mxu0
        %v1987 = vadd.f32 %v1511, %v1986
        %v1988 = vpop.f32.mrf.mxu0
        %v1989 = vadd.f32 %v1515, %v1988
        %1990 = vmatprep.mubr.f32.mxu0 0.0
        %1991 = vmatmul.mubr.f32.gmra.mxu0 %v1462
        %v1992 = vpop.f32.mrf.mxu0
        %v1993 = vadd.f32 %v1511, %v1992
        %v1994 = vpop.f32.mrf.mxu0
        %v1995 = vadd.f32 %v1515, %v1994
        %1996 = vmatprep.mubr.f32.mxu0 0.0
        %1997 = vmatmul.mubr.f32.gmra.mxu0 %v1463
        %v1998 = vpop.f32.mrf.mxu0
        %v1999 = vadd.f32 %v1511, %v1998
        %v2000 = vpop.f32.mrf.mxu0
        %v2001 = vadd.f32 %v1515, %v2000
        %2002 = vmatprep.mubr.f32.mxu0 0.0
        %2003 = vmatmul.mubr.f32.gmra.mxu0 %v1464
        %v2004 = vpop.f32.mrf.mxu0
        %v2005 = vadd.f32 %v1511, %v2004
        %v2006 = vpop.f32.mrf.mxu0
        %v2007 = vadd.f32 %v1515, %v2006
        %2008 = vmatprep.mubr.f32.mxu0 0.0
        %2009 = vmatmul.mubr.f32.gmra.mxu0 %v1465
        %v2010 = vpop.f32.mrf.mxu0
        %v2011 = vadd.f32 %v1511, %v2010
        %v2012 = vpop.f32.mrf.mxu0
        %v2013 = vadd.f32 %v1515, %v2012
        %2014 = vmatprep.mubr.f32.mxu0 0.0
        %2015 = vmatmul.mubr.f32.gmra.mxu0 %v1466
        %v2016 = vpop.f32.mrf.mxu0
        %v2017 = vadd.f32 %v1511, %v2016
        %v2018 = vpop.f32.mrf.mxu0
        %v2019 = vadd.f32 %v1515, %v2018
        %2020 = vmatprep.mubr.f32.mxu0 0.0
        %2021 = vmatmul.mubr.f32.gmra.mxu0 %v1467
        %v2022 = vpop.f32.mrf.mxu0
        %v2023 = vadd.f32 %v1511, %v2022
        %v2024 = vpop.f32.mrf.mxu0
        %v2025 = vadd.f32 %v1515, %v2024
        %2026 = vmatprep.mubr.f32.mxu0 0.0
        %2027 = vmatmul.mubr.f32.gmra.mxu0 %v1468
        %v2028 = vpop.f32.mrf.mxu0
        %v2029 = vadd.f32 %v1511, %v2028
        %v2030 = vpop.f32.mrf.mxu0
        %v2031 = vadd.f32 %v1515, %v2030
        %2032 = vmatprep.mubr.f32.mxu0 0.0
        %2033 = vmatmul.mubr.f32.gmra.mxu0 %v1469
        %v2034 = vpop.f32.mrf.mxu0
        %v2035 = vadd.f32 %v1511, %v2034
        %v2036 = vpop.f32.mrf.mxu0
        %v2037 = vadd.f32 %v1515, %v2036
        %2038 = vmatprep.mubr.f32.mxu0 0.0
        %2039 = vmatmul.mubr.f32.gmra.mxu0 %v1470
        %v2040 = vpop.f32.mrf.mxu0
        %v2041 = vadd.f32 %v1511, %v2040
        %v2042 = vpop.f32.mrf.mxu0
        %v2043 = vadd.f32 %v1515, %v2042
        %2044 = vmatprep.mubr.f32.mxu0 0.0
        %2045 = vmatmul.mubr.f32.gmra.mxu0 %v1471
        %v2046 = vpop.f32.mrf.mxu0
        %v2047 = vadd.f32 %v1511, %v2046
        %v2048 = vpop.f32.mrf.mxu0
        %v2049 = vadd.f32 %v1515, %v2048
        %2050 = vmatprep.mubr.f32.mxu0 0.0
        %2051 = vmatmul.mubr.f32.gmra.mxu0 %v1472
        %v2052 = vpop.f32.mrf.mxu0
        %v2053 = vadd.f32 %v1511, %v2052
        %v2054 = vpop.f32.mrf.mxu0
        %v2055 = vadd.f32 %v1515, %v2054
        %2056 = vmatprep.mubr.f32.mxu0 0.0
        %2057 = vmatmul.mubr.f32.gmra.mxu0 %v1473
        %v2058 = vpop.f32.mrf.mxu0
        %v2059 = vadd.f32 %v1511, %v2058
        %v2060 = vpop.f32.mrf.mxu0
        %v2061 = vadd.f32 %v1515, %v2060
        %2062 = vdwg.mxu0
        %v2063 = vmax.f32 %v1585, 0.0
        %v2064 = vmax.f32 %v1587, 0.0
        %v2065 = vmax.f32 %v1591, 0.0
        %v2066 = vmax.f32 %v1593, 0.0
        %v2067 = vmax.f32 %v1597, 0.0
        %v2068 = vmax.f32 %v1599, 0.0
        %v2069 = vmax.f32 %v1603, 0.0
        %v2070 = vmax.f32 %v1605, 0.0
        %v2071 = vmax.f32 %v1609, 0.0
        %v2072 = vmax.f32 %v1611, 0.0
        %v2073 = vmax.f32 %v1615, 0.0
        %v2074 = vmax.f32 %v1617, 0.0
        %v2075 = vmax.f32 %v1621, 0.0
        %v2076 = vmax.f32 %v1623, 0.0
        %v2077 = vmax.f32 %v1627, 0.0
        %v2078 = vmax.f32 %v1629, 0.0
        %v2079 = vmax.f32 %v1633, 0.0
        %v2080 = vmax.f32 %v1635, 0.0
        %v2081 = vmax.f32 %v1639, 0.0
        %v2082 = vmax.f32 %v1641, 0.0
        %v2083 = vmax.f32 %v1645, 0.0
        %v2084 = vmax.f32 %v1647, 0.0
        %v2085 = vmax.f32 %v1651, 0.0
        %v2086 = vmax.f32 %v1653, 0.0
        %v2087 = vmax.f32 %v1657, 0.0
        %v2088 = vmax.f32 %v1659, 0.0
        %v2089 = vmax.f32 %v1663, 0.0
        %v2090 = vmax.f32 %v1665, 0.0
        %v2091 = vmax.f32 %v1669, 0.0
        %v2092 = vmax.f32 %v1671, 0.0
        %v2093 = vmax.f32 %v1675, 0.0
        %v2094 = vmax.f32 %v1677, 0.0
        %v2095 = vmax.f32 %v1681, 0.0
        %v2096 = vmax.f32 %v1683, 0.0
        %v2097 = vmax.f32 %v1687, 0.0
        %v2098 = vmax.f32 %v1689, 0.0
        %v2099 = vmax.f32 %v1693, 0.0
        %v2100 = vmax.f32 %v1695, 0.0
        %v2101 = vmax.f32 %v1699, 0.0
        %v2102 = vmax.f32 %v1701, 0.0
        %v2103 = vmax.f32 %v1705, 0.0
        %v2104 = vmax.f32 %v1707, 0.0
        %v2105 = vmax.f32 %v1711, 0.0
        %v2106 = vmax.f32 %v1713, 0.0
        %v2107 = vmax.f32 %v1717, 0.0
        %v2108 = vmax.f32 %v1719, 0.0
        %v2109 = vmax.f32 %v1723, 0.0
        %v2110 = vmax.f32 %v1725, 0.0
        %v2111 = vmax.f32 %v1729, 0.0
        %v2112 = vmax.f32 %v1731, 0.0
        %v2113 = vmax.f32 %v1735, 0.0
        %v2114 = vmax.f32 %v1737, 0.0
        %v2115 = vmax.f32 %v1741, 0.0
        %v2116 = vmax.f32 %v1743, 0.0
        %v2117 = vmax.f32 %v1747, 0.0
        %v2118 = vmax.f32 %v1749, 0.0
        %v2119 = vmax.f32 %v1753, 0.0
        %v2120 = vmax.f32 %v1755, 0.0
        %v2121 = vmax.f32 %v1759, 0.0
        %v2122 = vmax.f32 %v1761, 0.0
        %v2123 = vmax.f32 %v1765, 0.0
        %v2124 = vmax.f32 %v1767, 0.0
        %v2125 = vmax.f32 %v1771, 0.0
        %v2126 = vmax.f32 %v1773, 0.0
        %v2127 = vmax.f32 %v1777, 0.0
        %v2128 = vmax.f32 %v1779, 0.0
        %v2129 = vmax.f32 %v1783, 0.0
        %v2130 = vmax.f32 %v1785, 0.0
        %v2131 = vmax.f32 %v1789, 0.0
        %v2132 = vmax.f32 %v1791, 0.0
        %v2133 = vmax.f32 %v1795, 0.0
        %v2134 = vmax.f32 %v1797, 0.0
        %v2135 = vmax.f32 %v1801, 0.0
        %v2136 = vmax.f32 %v1803, 0.0
        %v2137 = vmax.f32 %v1807, 0.0
        %v2138 = vmax.f32 %v1809, 0.0
        %v2139 = vmax.f32 %v1813, 0.0
        %v2140 = vmax.f32 %v1815, 0.0
        %v2141 = vmax.f32 %v1819, 0.0
        %v2142 = vmax.f32 %v1821, 0.0
        %v2143 = vmax.f32 %v1825, 0.0
        %v2144 = vmax.f32 %v1827, 0.0
        %v2145 = vmax.f32 %v1831, 0.0
        %v2146 = vmax.f32 %v1833, 0.0
        %v2147 = vmax.f32 %v1837, 0.0
        %v2148 = vmax.f32 %v1839, 0.0
        %v2149 = vmax.f32 %v1843, 0.0
        %v2150 = vmax.f32 %v1845, 0.0
        %v2151 = vmax.f32 %v1849, 0.0
        %v2152 = vmax.f32 %v1851, 0.0
        %v2153 = vmax.f32 %v1855, 0.0
        %v2154 = vmax.f32 %v1857, 0.0
        %v2155 = vmax.f32 %v1861, 0.0
        %v2156 = vmax.f32 %v1863, 0.0
        %v2157 = vmax.f32 %v1867, 0.0
        %v2158 = vmax.f32 %v1869, 0.0
        %v2159 = vmax.f32 %v1873, 0.0
        %v2160 = vmax.f32 %v1875, 0.0
        %v2161 = vmax.f32 %v1879, 0.0
        %v2162 = vmax.f32 %v1881, 0.0
        %v2163 = vmax.f32 %v1885, 0.0
        %v2164 = vmax.f32 %v1887, 0.0
        %v2165 = vmax.f32 %v1891, 0.0
        %v2166 = vmax.f32 %v1893, 0.0
        %v2167 = vmax.f32 %v1897, 0.0
        %v2168 = vmax.f32 %v1899, 0.0
        %v2169 = vmax.f32 %v1903, 0.0
        %v2170 = vmax.f32 %v1905, 0.0
        %v2171 = vmax.f32 %v1909, 0.0
        %v2172 = vmax.f32 %v1911, 0.0
        %v2173 = vmax.f32 %v1915, 0.0
        %v2174 = vmax.f32 %v1917, 0.0
        %v2175 = vmax.f32 %v1921, 0.0
        %v2176 = vmax.f32 %v1923, 0.0
        %v2177 = vmax.f32 %v1927, 0.0
        %v2178 = vmax.f32 %v1929, 0.0
        %v2179 = vmax.f32 %v1933, 0.0
        %v2180 = vmax.f32 %v1935, 0.0
        %v2181 = vmax.f32 %v1939, 0.0
        %v2182 = vmax.f32 %v1941, 0.0
        %v2183 = vmax.f32 %v1945, 0.0
        %v2184 = vmax.f32 %v1947, 0.0
        %v2185 = vmax.f32 %v1951, 0.0
        %v2186 = vmax.f32 %v1953, 0.0
        %v2187 = vmax.f32 %v1957, 0.0
        %v2188 = vmax.f32 %v1959, 0.0
        %v2189 = vmax.f32 %v1963, 0.0
        %v2190 = vmax.f32 %v1965, 0.0
        %v2191 = vmax.f32 %v1969, 0.0
        %v2192 = vmax.f32 %v1971, 0.0
        %v2193 = vmax.f32 %v1975, 0.0
        %v2194 = vmax.f32 %v1977, 0.0
        %v2195 = vmax.f32 %v1981, 0.0
        %v2196 = vmax.f32 %v1983, 0.0
        %v2197 = vmax.f32 %v1987, 0.0
        %v2198 = vmax.f32 %v1989, 0.0
        %v2199 = vmax.f32 %v1993, 0.0
        %v2200 = vmax.f32 %v1995, 0.0
        %v2201 = vmax.f32 %v1999, 0.0
        %v2202 = vmax.f32 %v2001, 0.0
        %v2203 = vmax.f32 %v2005, 0.0
        %v2204 = vmax.f32 %v2007, 0.0
        %v2205 = vmax.f32 %v2011, 0.0
        %v2206 = vmax.f32 %v2013, 0.0
        %v2207 = vmax.f32 %v2017, 0.0
        %v2208 = vmax.f32 %v2019, 0.0
        %v2209 = vmax.f32 %v2023, 0.0
        %v2210 = vmax.f32 %v2025, 0.0
        %v2211 = vmax.f32 %v2029, 0.0
        %v2212 = vmax.f32 %v2031, 0.0
        %v2213 = vmax.f32 %v2035, 0.0
        %v2214 = vmax.f32 %v2037, 0.0
        %v2215 = vmax.f32 %v2041, 0.0
        %v2216 = vmax.f32 %v2043, 0.0
        %v2217 = vmax.f32 %v2047, 0.0
        %v2218 = vmax.f32 %v2049, 0.0
        %v2219 = vmax.f32 %v2053, 0.0
        %v2220 = vmax.f32 %v2055, 0.0
        %v2221 = vmax.f32 %v2059, 0.0
        %v2222 = vmax.f32 %v2061, 0.0
        %v2223 = vld [vmem:[#allocation10] sm:$0xff]
        %v2224 = vld [vmem:[#allocation10 + $0x8] sm:$0xff]
        %v2225 = vld [vmem:[#allocation10 + $0x10] sm:$0xff]
        %v2226 = vld [vmem:[#allocation10 + $0x18] sm:$0xff]
        %v2227 = vld [vmem:[#allocation10 + $0x20] sm:$0xff]
        %v2228 = vld [vmem:[#allocation10 + $0x28] sm:$0xff]
        %v2229 = vld [vmem:[#allocation10 + $0x30] sm:$0xff]
        %v2230 = vld [vmem:[#allocation10 + $0x38] sm:$0xff]
        %v2231 = vld [vmem:[#allocation10 + $0x40] sm:$0xff]
        %v2232 = vld [vmem:[#allocation10 + $0x48] sm:$0xff]
        %v2233 = vld [vmem:[#allocation10 + $0x50] sm:$0xff]
        %v2234 = vld [vmem:[#allocation10 + $0x58] sm:$0xff]
        %v2235 = vld [vmem:[#allocation10 + $0x60] sm:$0xff]
        %v2236 = vld [vmem:[#allocation10 + $0x68] sm:$0xff]
        %v2237 = vld [vmem:[#allocation10 + $0x70] sm:$0xff]
        %v2238 = vld [vmem:[#allocation10 + $0x78] sm:$0xff]
        %v2239 = vld [vmem:[#allocation10 + $0x80] sm:$0xff]
        %v2240 = vld [vmem:[#allocation10 + $0x88] sm:$0xff]
        %v2241 = vld [vmem:[#allocation10 + $0x90] sm:$0xff]
        %v2242 = vld [vmem:[#allocation10 + $0x98] sm:$0xff]
        %v2243 = vld [vmem:[#allocation10 + $0xa0] sm:$0xff]
        %v2244 = vld [vmem:[#allocation10 + $0xa8] sm:$0xff]
        %v2245 = vld [vmem:[#allocation10 + $0xb0] sm:$0xff]
        %v2246 = vld [vmem:[#allocation10 + $0xb8] sm:$0xff]
        %v2247 = vld [vmem:[#allocation10 + $0xc0] sm:$0xff]
        %v2248 = vld [vmem:[#allocation10 + $0xc8] sm:$0xff]
        %v2249 = vld [vmem:[#allocation10 + $0xd0] sm:$0xff]
        %v2250 = vld [vmem:[#allocation10 + $0xd8] sm:$0xff]
        %v2251 = vld [vmem:[#allocation10 + $0xe0] sm:$0xff]
        %v2252 = vld [vmem:[#allocation10 + $0xe8] sm:$0xff]
        %v2253 = vld [vmem:[#allocation10 + $0xf0] sm:$0xff]
        %v2254 = vld [vmem:[#allocation10 + $0xf8] sm:$0xff]
        %v2255 = vld [vmem:[%s6] sm:$0x1]
        %v2257 = vlaneseq
        %v2258 = vshrl.u32 %v2257, 7
        %v2259 = vsub.s32 0, %v2258
        %v2260 = vrot.slane %v2255, %v2259
        %2262 = vmatprep.subr.mxu0 0.0
        %2263 = vmatpush1.msra.mxu0 %v2238
        %2264 = vmatprep.subr.mxu0 0.0
        %2265 = vmatpush1.msra.mxu0 %v2237
        %2266 = vmatprep.subr.mxu0 0.0
        %2267 = vmatpush1.msra.mxu0 %v2236
        %2268 = vmatprep.subr.mxu0 0.0
        %2269 = vmatpush1.msra.mxu0 %v2235
        %2270 = vmatprep.subr.mxu0 0.0
        %2271 = vmatpush1.msra.mxu0 %v2234
        %2272 = vmatprep.subr.mxu0 0.0
        %2273 = vmatpush1.msra.mxu0 %v2233
        %2274 = vmatprep.subr.mxu0 0.0
        %2275 = vmatpush1.msra.mxu0 %v2232
        %2276 = vmatprep.subr.mxu0 0.0
        %2277 = vmatpush1.msra.mxu0 %v2231
        %2278 = vmatprep.subr.mxu0 0.0
        %2279 = vmatpush1.msra.mxu0 %v2230
        %2280 = vmatprep.subr.mxu0 0.0
        %2281 = vmatpush1.msra.mxu0 %v2229
        %2282 = vmatprep.subr.mxu0 0.0
        %2283 = vmatpush1.msra.mxu0 %v2228
        %2284 = vmatprep.subr.mxu0 0.0
        %2285 = vmatpush1.msra.mxu0 %v2227
        %2286 = vmatprep.subr.mxu0 0.0
        %2287 = vmatpush1.msra.mxu0 %v2226
        %2288 = vmatprep.subr.mxu0 0.0
        %2289 = vmatpush1.msra.mxu0 %v2225
        %2290 = vmatprep.subr.mxu0 0.0
        %2291 = vmatpush1.msra.mxu0 %v2224
        %2292 = vmatprep.subr.mxu0 0.0
        %2293 = vmatpush1.msra.mxu0 %v2223
        %2294 = vmatprep.subr.mxu0 0.0
        %2295 = vmatpush2.msra.mxu0 %v2254
        %2296 = vmatprep.subr.mxu0 0.0
        %2297 = vmatpush2.msra.mxu0 %v2253
        %2298 = vmatprep.subr.mxu0 0.0
        %2299 = vmatpush2.msra.mxu0 %v2252
        %2300 = vmatprep.subr.mxu0 0.0
        %2301 = vmatpush2.msra.mxu0 %v2251
        %2302 = vmatprep.subr.mxu0 0.0
        %2303 = vmatpush2.msra.mxu0 %v2250
        %2304 = vmatprep.subr.mxu0 0.0
        %2305 = vmatpush2.msra.mxu0 %v2249
        %2306 = vmatprep.subr.mxu0 0.0
        %2307 = vmatpush2.msra.mxu0 %v2248
        %2308 = vmatprep.subr.mxu0 0.0
        %2309 = vmatpush2.msra.mxu0 %v2247
        %2310 = vmatprep.subr.mxu0 0.0
        %2311 = vmatpush2.msra.mxu0 %v2246
        %2312 = vmatprep.subr.mxu0 0.0
        %2313 = vmatpush2.msra.mxu0 %v2245
        %2314 = vmatprep.subr.mxu0 0.0
        %2315 = vmatpush2.msra.mxu0 %v2244
        %2316 = vmatprep.subr.mxu0 0.0
        %2317 = vmatpush2.msra.mxu0 %v2243
        %2318 = vmatprep.subr.mxu0 0.0
        %2319 = vmatpush2.msra.mxu0 %v2242
        %2320 = vmatprep.subr.mxu0 0.0
        %2321 = vmatpush2.msra.mxu0 %v2241
        %2322 = vmatprep.subr.mxu0 0.0
        %2323 = vmatpush2.msra.mxu0 %v2240
        %2324 = vmatprep.subr.mxu0 0.0
        %2325 = vmatpush2.msra.mxu0 %v2239
        %2326 = vmatprep.mubr.f32.mxu0 %v2064
        %2327 = vmatmul.mubr.f32.gmra.mxu0 %v2063
        %v2328 = vpop.f32.mrf.mxu0
        %v2329 = vadd.f32 %v2260, %v2328
        %v2330 = vpop.f32.mrf.mxu0
        %2331 = vmatprep.mubr.f32.mxu0 %v2066
        %2332 = vmatmul.mubr.f32.gmra.mxu0 %v2065
        %v2333 = vpop.f32.mrf.mxu0
        %v2334 = vadd.f32 %v2260, %v2333
        %v2335 = vpop.f32.mrf.mxu0
        %2336 = vmatprep.mubr.f32.mxu0 %v2068
        %2337 = vmatmul.mubr.f32.gmra.mxu0 %v2067
        %v2338 = vpop.f32.mrf.mxu0
        %v2339 = vadd.f32 %v2260, %v2338
        %v2340 = vpop.f32.mrf.mxu0
        %2341 = vmatprep.mubr.f32.mxu0 %v2070
        %2342 = vmatmul.mubr.f32.gmra.mxu0 %v2069
        %v2343 = vpop.f32.mrf.mxu0
        %v2344 = vadd.f32 %v2260, %v2343
        %v2345 = vpop.f32.mrf.mxu0
        %2346 = vmatprep.mubr.f32.mxu0 %v2072
        %2347 = vmatmul.mubr.f32.gmra.mxu0 %v2071
        %v2348 = vpop.f32.mrf.mxu0
        %v2349 = vadd.f32 %v2260, %v2348
        %v2350 = vpop.f32.mrf.mxu0
        %2351 = vmatprep.mubr.f32.mxu0 %v2074
        %2352 = vmatmul.mubr.f32.gmra.mxu0 %v2073
        %v2353 = vpop.f32.mrf.mxu0
        %v2354 = vadd.f32 %v2260, %v2353
        %v2355 = vpop.f32.mrf.mxu0
        %2356 = vmatprep.mubr.f32.mxu0 %v2076
        %2357 = vmatmul.mubr.f32.gmra.mxu0 %v2075
        %v2358 = vpop.f32.mrf.mxu0
        %v2359 = vadd.f32 %v2260, %v2358
        %v2360 = vpop.f32.mrf.mxu0
        %2361 = vmatprep.mubr.f32.mxu0 %v2078
        %2362 = vmatmul.mubr.f32.gmra.mxu0 %v2077
        %v2363 = vpop.f32.mrf.mxu0
        %v2364 = vadd.f32 %v2260, %v2363
        %v2365 = vpop.f32.mrf.mxu0
        %2366 = vmatprep.mubr.f32.mxu0 %v2080
        %2367 = vmatmul.mubr.f32.gmra.mxu0 %v2079
        %v2368 = vpop.f32.mrf.mxu0
        %v2369 = vadd.f32 %v2260, %v2368
        %v2370 = vpop.f32.mrf.mxu0
        %2371 = vmatprep.mubr.f32.mxu0 %v2082
        %2372 = vmatmul.mubr.f32.gmra.mxu0 %v2081
        %v2373 = vpop.f32.mrf.mxu0
        %v2374 = vadd.f32 %v2260, %v2373
        %v2375 = vpop.f32.mrf.mxu0
        %2376 = vmatprep.mubr.f32.mxu0 %v2084
        %2377 = vmatmul.mubr.f32.gmra.mxu0 %v2083
        %v2378 = vpop.f32.mrf.mxu0
        %v2379 = vadd.f32 %v2260, %v2378
        %v2380 = vpop.f32.mrf.mxu0
        %2381 = vmatprep.mubr.f32.mxu0 %v2086
        %2382 = vmatmul.mubr.f32.gmra.mxu0 %v2085
        %v2383 = vpop.f32.mrf.mxu0
        %v2384 = vadd.f32 %v2260, %v2383
        %v2385 = vpop.f32.mrf.mxu0
        %2386 = vmatprep.mubr.f32.mxu0 %v2088
        %2387 = vmatmul.mubr.f32.gmra.mxu0 %v2087
        %v2388 = vpop.f32.mrf.mxu0
        %v2389 = vadd.f32 %v2260, %v2388
        %v2390 = vpop.f32.mrf.mxu0
        %2391 = vmatprep.mubr.f32.mxu0 %v2090
        %2392 = vmatmul.mubr.f32.gmra.mxu0 %v2089
        %v2393 = vpop.f32.mrf.mxu0
        %v2394 = vadd.f32 %v2260, %v2393
        %v2395 = vpop.f32.mrf.mxu0
        %2396 = vmatprep.mubr.f32.mxu0 %v2092
        %2397 = vmatmul.mubr.f32.gmra.mxu0 %v2091
        %v2398 = vpop.f32.mrf.mxu0
        %v2399 = vadd.f32 %v2260, %v2398
        %v2400 = vpop.f32.mrf.mxu0
        %2401 = vmatprep.mubr.f32.mxu0 %v2094
        %2402 = vmatmul.mubr.f32.gmra.mxu0 %v2093
        %v2403 = vpop.f32.mrf.mxu0
        %v2404 = vadd.f32 %v2260, %v2403
        %v2405 = vpop.f32.mrf.mxu0
        %2406 = vmatprep.mubr.f32.mxu0 %v2096
        %2407 = vmatmul.mubr.f32.gmra.mxu0 %v2095
        %v2408 = vpop.f32.mrf.mxu0
        %v2409 = vadd.f32 %v2260, %v2408
        %v2410 = vpop.f32.mrf.mxu0
        %2411 = vmatprep.mubr.f32.mxu0 %v2098
        %2412 = vmatmul.mubr.f32.gmra.mxu0 %v2097
        %v2413 = vpop.f32.mrf.mxu0
        %v2414 = vadd.f32 %v2260, %v2413
        %v2415 = vpop.f32.mrf.mxu0
        %2416 = vmatprep.mubr.f32.mxu0 %v2100
        %2417 = vmatmul.mubr.f32.gmra.mxu0 %v2099
        %v2418 = vpop.f32.mrf.mxu0
        %v2419 = vadd.f32 %v2260, %v2418
        %v2420 = vpop.f32.mrf.mxu0
        %2421 = vmatprep.mubr.f32.mxu0 %v2102
        %2422 = vmatmul.mubr.f32.gmra.mxu0 %v2101
        %v2423 = vpop.f32.mrf.mxu0
        %v2424 = vadd.f32 %v2260, %v2423
        %v2425 = vpop.f32.mrf.mxu0
        %2426 = vmatprep.mubr.f32.mxu0 %v2104
        %2427 = vmatmul.mubr.f32.gmra.mxu0 %v2103
        %v2428 = vpop.f32.mrf.mxu0
        %v2429 = vadd.f32 %v2260, %v2428
        %v2430 = vpop.f32.mrf.mxu0
        %2431 = vmatprep.mubr.f32.mxu0 %v2106
        %2432 = vmatmul.mubr.f32.gmra.mxu0 %v2105
        %v2433 = vpop.f32.mrf.mxu0
        %v2434 = vadd.f32 %v2260, %v2433
        %v2435 = vpop.f32.mrf.mxu0
        %2436 = vmatprep.mubr.f32.mxu0 %v2108
        %2437 = vmatmul.mubr.f32.gmra.mxu0 %v2107
        %v2438 = vpop.f32.mrf.mxu0
        %v2439 = vadd.f32 %v2260, %v2438
        %v2440 = vpop.f32.mrf.mxu0
        %2441 = vmatprep.mubr.f32.mxu0 %v2110
        %2442 = vmatmul.mubr.f32.gmra.mxu0 %v2109
        %v2443 = vpop.f32.mrf.mxu0
        %v2444 = vadd.f32 %v2260, %v2443
        %v2445 = vpop.f32.mrf.mxu0
        %2446 = vmatprep.mubr.f32.mxu0 %v2112
        %2447 = vmatmul.mubr.f32.gmra.mxu0 %v2111
        %v2448 = vpop.f32.mrf.mxu0
        %v2449 = vadd.f32 %v2260, %v2448
        %v2450 = vpop.f32.mrf.mxu0
        %2451 = vmatprep.mubr.f32.mxu0 %v2114
        %2452 = vmatmul.mubr.f32.gmra.mxu0 %v2113
        %v2453 = vpop.f32.mrf.mxu0
        %v2454 = vadd.f32 %v2260, %v2453
        %v2455 = vpop.f32.mrf.mxu0
        %2456 = vmatprep.mubr.f32.mxu0 %v2116
        %2457 = vmatmul.mubr.f32.gmra.mxu0 %v2115
        %v2458 = vpop.f32.mrf.mxu0
        %v2459 = vadd.f32 %v2260, %v2458
        %v2460 = vpop.f32.mrf.mxu0
        %2461 = vmatprep.mubr.f32.mxu0 %v2118
        %2462 = vmatmul.mubr.f32.gmra.mxu0 %v2117
        %v2463 = vpop.f32.mrf.mxu0
        %v2464 = vadd.f32 %v2260, %v2463
        %v2465 = vpop.f32.mrf.mxu0
        %2466 = vmatprep.mubr.f32.mxu0 %v2120
        %2467 = vmatmul.mubr.f32.gmra.mxu0 %v2119
        %v2468 = vpop.f32.mrf.mxu0
        %v2469 = vadd.f32 %v2260, %v2468
        %v2470 = vpop.f32.mrf.mxu0
        %2471 = vmatprep.mubr.f32.mxu0 %v2122
        %2472 = vmatmul.mubr.f32.gmra.mxu0 %v2121
        %v2473 = vpop.f32.mrf.mxu0
        %v2474 = vadd.f32 %v2260, %v2473
        %v2475 = vpop.f32.mrf.mxu0
        %2476 = vmatprep.mubr.f32.mxu0 %v2124
        %2477 = vmatmul.mubr.f32.gmra.mxu0 %v2123
        %v2478 = vpop.f32.mrf.mxu0
        %v2479 = vadd.f32 %v2260, %v2478
        %v2480 = vpop.f32.mrf.mxu0
        %2481 = vmatprep.mubr.f32.mxu0 %v2126
        %2482 = vmatmul.mubr.f32.gmra.mxu0 %v2125
        %v2483 = vpop.f32.mrf.mxu0
        %v2484 = vadd.f32 %v2260, %v2483
        %v2485 = vpop.f32.mrf.mxu0
        %2486 = vmatprep.mubr.f32.mxu0 %v2128
        %2487 = vmatmul.mubr.f32.gmra.mxu0 %v2127
        %v2488 = vpop.f32.mrf.mxu0
        %v2489 = vadd.f32 %v2260, %v2488
        %v2490 = vpop.f32.mrf.mxu0
        %2491 = vmatprep.mubr.f32.mxu0 %v2130
        %2492 = vmatmul.mubr.f32.gmra.mxu0 %v2129
        %v2493 = vpop.f32.mrf.mxu0
        %v2494 = vadd.f32 %v2260, %v2493
        %v2495 = vpop.f32.mrf.mxu0
        %2496 = vmatprep.mubr.f32.mxu0 %v2132
        %2497 = vmatmul.mubr.f32.gmra.mxu0 %v2131
        %v2498 = vpop.f32.mrf.mxu0
        %v2499 = vadd.f32 %v2260, %v2498
        %v2500 = vpop.f32.mrf.mxu0
        %2501 = vmatprep.mubr.f32.mxu0 %v2134
        %2502 = vmatmul.mubr.f32.gmra.mxu0 %v2133
        %v2503 = vpop.f32.mrf.mxu0
        %v2504 = vadd.f32 %v2260, %v2503
        %v2505 = vpop.f32.mrf.mxu0
        %2506 = vmatprep.mubr.f32.mxu0 %v2136
        %2507 = vmatmul.mubr.f32.gmra.mxu0 %v2135
        %v2508 = vpop.f32.mrf.mxu0
        %v2509 = vadd.f32 %v2260, %v2508
        %v2510 = vpop.f32.mrf.mxu0
        %2511 = vmatprep.mubr.f32.mxu0 %v2138
        %2512 = vmatmul.mubr.f32.gmra.mxu0 %v2137
        %v2513 = vpop.f32.mrf.mxu0
        %v2514 = vadd.f32 %v2260, %v2513
        %v2515 = vpop.f32.mrf.mxu0
        %2516 = vmatprep.mubr.f32.mxu0 %v2140
        %2517 = vmatmul.mubr.f32.gmra.mxu0 %v2139
        %v2518 = vpop.f32.mrf.mxu0
        %v2519 = vadd.f32 %v2260, %v2518
        %v2520 = vpop.f32.mrf.mxu0
        %2521 = vmatprep.mubr.f32.mxu0 %v2142
        %2522 = vmatmul.mubr.f32.gmra.mxu0 %v2141
        %v2523 = vpop.f32.mrf.mxu0
        %v2524 = vadd.f32 %v2260, %v2523
        %v2525 = vpop.f32.mrf.mxu0
        %2526 = vmatprep.mubr.f32.mxu0 %v2144
        %2527 = vmatmul.mubr.f32.gmra.mxu0 %v2143
        %v2528 = vpop.f32.mrf.mxu0
        %v2529 = vadd.f32 %v2260, %v2528
        %v2530 = vpop.f32.mrf.mxu0
        %2531 = vmatprep.mubr.f32.mxu0 %v2146
        %2532 = vmatmul.mubr.f32.gmra.mxu0 %v2145
        %v2533 = vpop.f32.mrf.mxu0
        %v2534 = vadd.f32 %v2260, %v2533
        %v2535 = vpop.f32.mrf.mxu0
        %2536 = vmatprep.mubr.f32.mxu0 %v2148
        %2537 = vmatmul.mubr.f32.gmra.mxu0 %v2147
        %v2538 = vpop.f32.mrf.mxu0
        %v2539 = vadd.f32 %v2260, %v2538
        %v2540 = vpop.f32.mrf.mxu0
        %2541 = vmatprep.mubr.f32.mxu0 %v2150
        %2542 = vmatmul.mubr.f32.gmra.mxu0 %v2149
        %v2543 = vpop.f32.mrf.mxu0
        %v2544 = vadd.f32 %v2260, %v2543
        %v2545 = vpop.f32.mrf.mxu0
        %2546 = vmatprep.mubr.f32.mxu0 %v2152
        %2547 = vmatmul.mubr.f32.gmra.mxu0 %v2151
        %v2548 = vpop.f32.mrf.mxu0
        %v2549 = vadd.f32 %v2260, %v2548
        %v2550 = vpop.f32.mrf.mxu0
        %2551 = vmatprep.mubr.f32.mxu0 %v2154
        %2552 = vmatmul.mubr.f32.gmra.mxu0 %v2153
        %v2553 = vpop.f32.mrf.mxu0
        %v2554 = vadd.f32 %v2260, %v2553
        %v2555 = vpop.f32.mrf.mxu0
        %2556 = vmatprep.mubr.f32.mxu0 %v2156
        %2557 = vmatmul.mubr.f32.gmra.mxu0 %v2155
        %v2558 = vpop.f32.mrf.mxu0
        %v2559 = vadd.f32 %v2260, %v2558
        %v2560 = vpop.f32.mrf.mxu0
        %2561 = vmatprep.mubr.f32.mxu0 %v2158
        %2562 = vmatmul.mubr.f32.gmra.mxu0 %v2157
        %v2563 = vpop.f32.mrf.mxu0
        %v2564 = vadd.f32 %v2260, %v2563
        %v2565 = vpop.f32.mrf.mxu0
        %2566 = vmatprep.mubr.f32.mxu0 %v2160
        %2567 = vmatmul.mubr.f32.gmra.mxu0 %v2159
        %v2568 = vpop.f32.mrf.mxu0
        %v2569 = vadd.f32 %v2260, %v2568
        %v2570 = vpop.f32.mrf.mxu0
        %2571 = vmatprep.mubr.f32.mxu0 %v2162
        %2572 = vmatmul.mubr.f32.gmra.mxu0 %v2161
        %v2573 = vpop.f32.mrf.mxu0
        %v2574 = vadd.f32 %v2260, %v2573
        %v2575 = vpop.f32.mrf.mxu0
        %2576 = vmatprep.mubr.f32.mxu0 %v2164
        %2577 = vmatmul.mubr.f32.gmra.mxu0 %v2163
        %v2578 = vpop.f32.mrf.mxu0
        %v2579 = vadd.f32 %v2260, %v2578
        %v2580 = vpop.f32.mrf.mxu0
        %2581 = vmatprep.mubr.f32.mxu0 %v2166
        %2582 = vmatmul.mubr.f32.gmra.mxu0 %v2165
        %v2583 = vpop.f32.mrf.mxu0
        %v2584 = vadd.f32 %v2260, %v2583
        %v2585 = vpop.f32.mrf.mxu0
        %2586 = vmatprep.mubr.f32.mxu0 %v2168
        %2587 = vmatmul.mubr.f32.gmra.mxu0 %v2167
        %v2588 = vpop.f32.mrf.mxu0
        %v2589 = vadd.f32 %v2260, %v2588
        %v2590 = vpop.f32.mrf.mxu0
        %2591 = vmatprep.mubr.f32.mxu0 %v2170
        %2592 = vmatmul.mubr.f32.gmra.mxu0 %v2169
        %v2593 = vpop.f32.mrf.mxu0
        %v2594 = vadd.f32 %v2260, %v2593
        %v2595 = vpop.f32.mrf.mxu0
        %2596 = vmatprep.mubr.f32.mxu0 %v2172
        %2597 = vmatmul.mubr.f32.gmra.mxu0 %v2171
        %v2598 = vpop.f32.mrf.mxu0
        %v2599 = vadd.f32 %v2260, %v2598
        %v2600 = vpop.f32.mrf.mxu0
        %2601 = vmatprep.mubr.f32.mxu0 %v2174
        %2602 = vmatmul.mubr.f32.gmra.mxu0 %v2173
        %v2603 = vpop.f32.mrf.mxu0
        %v2604 = vadd.f32 %v2260, %v2603
        %v2605 = vpop.f32.mrf.mxu0
        %2606 = vmatprep.mubr.f32.mxu0 %v2176
        %2607 = vmatmul.mubr.f32.gmra.mxu0 %v2175
        %v2608 = vpop.f32.mrf.mxu0
        %v2609 = vadd.f32 %v2260, %v2608
        %v2610 = vpop.f32.mrf.mxu0
        %2611 = vmatprep.mubr.f32.mxu0 %v2178
        %2612 = vmatmul.mubr.f32.gmra.mxu0 %v2177
        %v2613 = vpop.f32.mrf.mxu0
        %v2614 = vadd.f32 %v2260, %v2613
        %v2615 = vpop.f32.mrf.mxu0
        %2616 = vmatprep.mubr.f32.mxu0 %v2180
        %2617 = vmatmul.mubr.f32.gmra.mxu0 %v2179
        %v2618 = vpop.f32.mrf.mxu0
        %v2619 = vadd.f32 %v2260, %v2618
        %v2620 = vpop.f32.mrf.mxu0
        %2621 = vmatprep.mubr.f32.mxu0 %v2182
        %2622 = vmatmul.mubr.f32.gmra.mxu0 %v2181
        %v2623 = vpop.f32.mrf.mxu0
        %v2624 = vadd.f32 %v2260, %v2623
        %v2625 = vpop.f32.mrf.mxu0
        %2626 = vmatprep.mubr.f32.mxu0 %v2184
        %2627 = vmatmul.mubr.f32.gmra.mxu0 %v2183
        %v2628 = vpop.f32.mrf.mxu0
        %v2629 = vadd.f32 %v2260, %v2628
        %v2630 = vpop.f32.mrf.mxu0
        %2631 = vmatprep.mubr.f32.mxu0 %v2186
        %2632 = vmatmul.mubr.f32.gmra.mxu0 %v2185
        %v2633 = vpop.f32.mrf.mxu0
        %v2634 = vadd.f32 %v2260, %v2633
        %v2635 = vpop.f32.mrf.mxu0
        %2636 = vmatprep.mubr.f32.mxu0 %v2188
        %2637 = vmatmul.mubr.f32.gmra.mxu0 %v2187
        %v2638 = vpop.f32.mrf.mxu0
        %v2639 = vadd.f32 %v2260, %v2638
        %v2640 = vpop.f32.mrf.mxu0
        %2641 = vmatprep.mubr.f32.mxu0 %v2190
        %2642 = vmatmul.mubr.f32.gmra.mxu0 %v2189
        %v2643 = vpop.f32.mrf.mxu0
        %v2644 = vadd.f32 %v2260, %v2643
        %v2645 = vpop.f32.mrf.mxu0
        %2646 = vmatprep.mubr.f32.mxu0 %v2192
        %2647 = vmatmul.mubr.f32.gmra.mxu0 %v2191
        %v2648 = vpop.f32.mrf.mxu0
        %v2649 = vadd.f32 %v2260, %v2648
        %v2650 = vpop.f32.mrf.mxu0
        %2651 = vmatprep.mubr.f32.mxu0 %v2194
        %2652 = vmatmul.mubr.f32.gmra.mxu0 %v2193
        %v2653 = vpop.f32.mrf.mxu0
        %v2654 = vadd.f32 %v2260, %v2653
        %v2655 = vpop.f32.mrf.mxu0
        %2656 = vmatprep.mubr.f32.mxu0 %v2196
        %2657 = vmatmul.mubr.f32.gmra.mxu0 %v2195
        %v2658 = vpop.f32.mrf.mxu0
        %v2659 = vadd.f32 %v2260, %v2658
        %v2660 = vpop.f32.mrf.mxu0
        %2661 = vmatprep.mubr.f32.mxu0 %v2198
        %2662 = vmatmul.mubr.f32.gmra.mxu0 %v2197
        %v2663 = vpop.f32.mrf.mxu0
        %v2664 = vadd.f32 %v2260, %v2663
        %v2665 = vpop.f32.mrf.mxu0
        %2666 = vmatprep.mubr.f32.mxu0 %v2200
        %2667 = vmatmul.mubr.f32.gmra.mxu0 %v2199
        %v2668 = vpop.f32.mrf.mxu0
        %v2669 = vadd.f32 %v2260, %v2668
        %v2670 = vpop.f32.mrf.mxu0
        %2671 = vmatprep.mubr.f32.mxu0 %v2202
        %2672 = vmatmul.mubr.f32.gmra.mxu0 %v2201
        %v2673 = vpop.f32.mrf.mxu0
        %v2674 = vadd.f32 %v2260, %v2673
        %v2675 = vpop.f32.mrf.mxu0
        %2676 = vmatprep.mubr.f32.mxu0 %v2204
        %2677 = vmatmul.mubr.f32.gmra.mxu0 %v2203
        %v2678 = vpop.f32.mrf.mxu0
        %v2679 = vadd.f32 %v2260, %v2678
        %v2680 = vpop.f32.mrf.mxu0
        %2681 = vmatprep.mubr.f32.mxu0 %v2206
        %2682 = vmatmul.mubr.f32.gmra.mxu0 %v2205
        %v2683 = vpop.f32.mrf.mxu0
        %v2684 = vadd.f32 %v2260, %v2683
        %v2685 = vpop.f32.mrf.mxu0
        %2686 = vmatprep.mubr.f32.mxu0 %v2208
        %2687 = vmatmul.mubr.f32.gmra.mxu0 %v2207
        %v2688 = vpop.f32.mrf.mxu0
        %v2689 = vadd.f32 %v2260, %v2688
        %v2690 = vpop.f32.mrf.mxu0
        %2691 = vmatprep.mubr.f32.mxu0 %v2210
        %2692 = vmatmul.mubr.f32.gmra.mxu0 %v2209
        %v2693 = vpop.f32.mrf.mxu0
        %v2694 = vadd.f32 %v2260, %v2693
        %v2695 = vpop.f32.mrf.mxu0
        %2696 = vmatprep.mubr.f32.mxu0 %v2212
        %2697 = vmatmul.mubr.f32.gmra.mxu0 %v2211
        %v2698 = vpop.f32.mrf.mxu0
        %v2699 = vadd.f32 %v2260, %v2698
        %v2700 = vpop.f32.mrf.mxu0
        %2701 = vmatprep.mubr.f32.mxu0 %v2214
        %2702 = vmatmul.mubr.f32.gmra.mxu0 %v2213
        %v2703 = vpop.f32.mrf.mxu0
        %v2704 = vadd.f32 %v2260, %v2703
        %v2705 = vpop.f32.mrf.mxu0
        %2706 = vmatprep.mubr.f32.mxu0 %v2216
        %2707 = vmatmul.mubr.f32.gmra.mxu0 %v2215
        %v2708 = vpop.f32.mrf.mxu0
        %v2709 = vadd.f32 %v2260, %v2708
        %v2710 = vpop.f32.mrf.mxu0
        %2711 = vmatprep.mubr.f32.mxu0 %v2218
        %2712 = vmatmul.mubr.f32.gmra.mxu0 %v2217
        %v2713 = vpop.f32.mrf.mxu0
        %v2714 = vadd.f32 %v2260, %v2713
        %v2715 = vpop.f32.mrf.mxu0
        %2716 = vmatprep.mubr.f32.mxu0 %v2220
        %2717 = vmatmul.mubr.f32.gmra.mxu0 %v2219
        %v2718 = vpop.f32.mrf.mxu0
        %v2719 = vadd.f32 %v2260, %v2718
        %v2720 = vpop.f32.mrf.mxu0
        %2721 = vmatprep.mubr.f32.mxu0 %v2222
        %2722 = vmatmul.mubr.f32.gmra.mxu0 %v2221
        %v2723 = vpop.f32.mrf.mxu0
        %v2724 = vadd.f32 %v2260, %v2723
        %v2725 = vpop.f32.mrf.mxu0
        %2726 = vdwg.mxu0
        %2727 = vst [vmem:[%s355] sm:$0xff] %v2329
        %2728 = vst [vmem:[%s355 + $0x8] sm:$0xff] %v2334
        %2729 = vst [vmem:[%s355 + $0x10] sm:$0xff] %v2339
        %2730 = vst [vmem:[%s355 + $0x18] sm:$0xff] %v2344
        %2731 = vst [vmem:[%s355 + $0x20] sm:$0xff] %v2349
        %2732 = vst [vmem:[%s355 + $0x28] sm:$0xff] %v2354
        %2733 = vst [vmem:[%s355 + $0x30] sm:$0xff] %v2359
        %2734 = vst [vmem:[%s355 + $0x38] sm:$0xff] %v2364
        %2735 = vst [vmem:[%s355 + $0x40] sm:$0xff] %v2369
        %2736 = vst [vmem:[%s355 + $0x48] sm:$0xff] %v2374
        %2737 = vst [vmem:[%s355 + $0x50] sm:$0xff] %v2379
        %2738 = vst [vmem:[%s355 + $0x58] sm:$0xff] %v2384
        %2739 = vst [vmem:[%s355 + $0x60] sm:$0xff] %v2389
        %2740 = vst [vmem:[%s355 + $0x68] sm:$0xff] %v2394
        %2741 = vst [vmem:[%s355 + $0x70] sm:$0xff] %v2399
        %2742 = vst [vmem:[%s355 + $0x78] sm:$0xff] %v2404
        %2743 = vst [vmem:[%s355 + $0x80] sm:$0xff] %v2409
        %2744 = vst [vmem:[%s355 + $0x88] sm:$0xff] %v2414
        %2745 = vst [vmem:[%s355 + $0x90] sm:$0xff] %v2419
        %2746 = vst [vmem:[%s355 + $0x98] sm:$0xff] %v2424
        %2747 = vst [vmem:[%s355 + $0xa0] sm:$0xff] %v2429
        %2748 = vst [vmem:[%s355 + $0xa8] sm:$0xff] %v2434
        %2749 = vst [vmem:[%s355 + $0xb0] sm:$0xff] %v2439
        %2750 = vst [vmem:[%s355 + $0xb8] sm:$0xff] %v2444
        %2751 = vst [vmem:[%s355 + $0xc0] sm:$0xff] %v2449
        %2752 = vst [vmem:[%s355 + $0xc8] sm:$0xff] %v2454
        %2753 = vst [vmem:[%s355 + $0xd0] sm:$0xff] %v2459
        %2754 = vst [vmem:[%s355 + $0xd8] sm:$0xff] %v2464
        %2755 = vst [vmem:[%s355 + $0xe0] sm:$0xff] %v2469
        %2756 = vst [vmem:[%s355 + $0xe8] sm:$0xff] %v2474
        %2757 = vst [vmem:[%s355 + $0xf0] sm:$0xff] %v2479
        %2758 = vst [vmem:[%s355 + $0xf8] sm:$0xff] %v2484
        %2759 = vst [vmem:[%s355 + $0x100] sm:$0xff] %v2489
        %2760 = vst [vmem:[%s355 + $0x108] sm:$0xff] %v2494
        %2761 = vst [vmem:[%s355 + $0x110] sm:$0xff] %v2499
        %2762 = vst [vmem:[%s355 + $0x118] sm:$0xff] %v2504
        %2763 = vst [vmem:[%s355 + $0x120] sm:$0xff] %v2509
        %2764 = vst [vmem:[%s355 + $0x128] sm:$0xff] %v2514
        %2765 = vst [vmem:[%s355 + $0x130] sm:$0xff] %v2519
        %2766 = vst [vmem:[%s355 + $0x138] sm:$0xff] %v2524
        %2767 = vst [vmem:[%s355 + $0x140] sm:$0xff] %v2529
        %2768 = vst [vmem:[%s355 + $0x148] sm:$0xff] %v2534
        %2769 = vst [vmem:[%s355 + $0x150] sm:$0xff] %v2539
        %2770 = vst [vmem:[%s355 + $0x158] sm:$0xff] %v2544
        %2771 = vst [vmem:[%s355 + $0x160] sm:$0xff] %v2549
        %2772 = vst [vmem:[%s355 + $0x168] sm:$0xff] %v2554
        %2773 = vst [vmem:[%s355 + $0x170] sm:$0xff] %v2559
        %2774 = vst [vmem:[%s355 + $0x178] sm:$0xff] %v2564
        %2775 = vst [vmem:[%s355 + $0x180] sm:$0xff] %v2569
        %2776 = vst [vmem:[%s355 + $0x188] sm:$0xff] %v2574
        %2777 = vst [vmem:[%s355 + $0x190] sm:$0xff] %v2579
        %2778 = vst [vmem:[%s355 + $0x198] sm:$0xff] %v2584
        %2779 = vst [vmem:[%s355 + $0x1a0] sm:$0xff] %v2589
        %2780 = vst [vmem:[%s355 + $0x1a8] sm:$0xff] %v2594
        %2781 = vst [vmem:[%s355 + $0x1b0] sm:$0xff] %v2599
        %2782 = vst [vmem:[%s355 + $0x1b8] sm:$0xff] %v2604
        %2783 = vst [vmem:[%s355 + $0x1c0] sm:$0xff] %v2609
        %2784 = vst [vmem:[%s355 + $0x1c8] sm:$0xff] %v2614
        %2785 = vst [vmem:[%s355 + $0x1d0] sm:$0xff] %v2619
        %2786 = vst [vmem:[%s355 + $0x1d8] sm:$0xff] %v2624
        %2787 = vst [vmem:[%s355 + $0x1e0] sm:$0xff] %v2629
        %2788 = vst [vmem:[%s355 + $0x1e8] sm:$0xff] %v2634
        %2789 = vst [vmem:[%s355 + $0x1f0] sm:$0xff] %v2639
        %2790 = vst [vmem:[%s355 + $0x1f8] sm:$0xff] %v2644
        %2791 = vst [vmem:[%s355 + $0x200] sm:$0xff] %v2649
        %2792 = vst [vmem:[%s355 + $0x208] sm:$0xff] %v2654
        %2793 = vst [vmem:[%s355 + $0x210] sm:$0xff] %v2659
        %2794 = vst [vmem:[%s355 + $0x218] sm:$0xff] %v2664
        %2795 = vst [vmem:[%s355 + $0x220] sm:$0xff] %v2669
        %2796 = vst [vmem:[%s355 + $0x228] sm:$0xff] %v2674
        %2797 = vst [vmem:[%s355 + $0x230] sm:$0xff] %v2679
        %2798 = vst [vmem:[%s355 + $0x238] sm:$0xff] %v2684
        %2799 = vst [vmem:[%s355 + $0x240] sm:$0xff] %v2689
        %2800 = vst [vmem:[%s355 + $0x248] sm:$0xff] %v2694
        %2801 = vst [vmem:[%s355 + $0x250] sm:$0xff] %v2699
        %2802 = vst [vmem:[%s355 + $0x258] sm:$0xff] %v2704
        %2803 = vst [vmem:[%s355 + $0x260] sm:$0xff] %v2709
        %2804 = vst [vmem:[%s355 + $0x268] sm:$0xff] %v2714
        %2805 = vst [vmem:[%s355 + $0x270] sm:$0xff] %v2719
        %2806 = vst [vmem:[%s355 + $0x278] sm:$0xff] %v2724
        %s2807 = sand.u32 %s186, 1
        %s2808 = scalar_lea.sflag [#allocation4], %s2807
        %s2809 = sand.u32 %s186, 1
        %s2810 = smul.addr %s2809, 640
        %s2811 = scalar_lea.vmem [#allocation11], %s2810
        // Predicated region
        $region69: #{tpu_custom_call.1} parent=47 // pred_check
          %p2812 = pneg %p196
        $region70: #{tpu_custom_call.1} parent=47 // pred_check_branch
          %2814 = sbr.rel (%p2812) target = $region72
        $region71: #{tpu_custom_call.1} parent=47 // pred_region
          %s2815 = smul.u32 10, %s26
          %s2817 = ssub.s32 10240, 10240
          %2818 = vsyncadd %s2808, %s2817
          %s2819 = smul.addr %s2815, 8
          %s2820 = smul.addr %s2819, 128
          %s2821 = scalar_lea.hbm %s7, %s2820
          %s2822 = sshll.u32 %s2811, 4
          %s2823 = int_to_ptr.vmem [resolvable:$true] %s2822
          %2828 = dma.vmem_to_hbm [thread:$0]  %s2823, 10240, %s2821, %s2808, 128, 128, 8
        $region72: #{tpu_custom_call.1} parent=47 // pred_fallthru
          _
      $region48: #{tpu_custom_call.1} parent=5 // pred_fallthru
        _
      %p2829 = scmp.le.s32.totalorder 2, %s21
      // Predicated region
      $region73: #{tpu_custom_call.1} parent=5 // pred_check
        %p2830 = pneg %p2829
      $region74: #{tpu_custom_call.1} parent=5 // pred_check_branch
        %2832 = sbr.rel (%p2830) target = $region76
      $region75: #{tpu_custom_call.1} parent=5 // pred_region
        %s2833 = ssub.s32 %s21, 2
        // Predicated region
        $region77: #{tpu_custom_call.1} parent=75 // pred_check
          %p2834 = pneg %p202
        $region78: #{tpu_custom_call.1} parent=75 // pred_check_branch
          %2836 = sbr.rel (%p2834) target = $region80
        $region79: #{tpu_custom_call.1} parent=75 // pred_region
          %s2837 = sand.u32 %s187, 1
          %s2838 = scalar_lea.sflag [#allocation4], %s2837
          %s2839 = sand.u32 %s187, 1
          %s2840 = smul.addr %s2839, 640
          %s2841 = scalar_lea.vmem [#allocation11], %s2840
          %2842 = dma.done %s2838, 10240
        $region80: #{tpu_custom_call.1} parent=75 // pred_fallthru
          _
      $region76: #{tpu_custom_call.1} parent=5 // pred_fallthru
        _
    $region6: #{tpu_custom_call.1} parent=1 // loop_footer
      %s25 = sadd.s32 1, %s21
    $region7: #{tpu_custom_call.1} parent=1 // loop_footer_branch
      %20 = sbr.rel target = $region3
    $region8: #{tpu_custom_call.1} parent=1 // loop_exit
      _
    %2843 = vsyncpa [#allocation3], 1
    %s2844 = scalar_lea.sflag [#allocation3], 1
    %2845 = vsyncpa %s2844, 1
    %2846 = vsyncpa [#allocation6], 1
    %2847 = vsyncpa [#allocation9], 1
    %2848 = vsyncpa [#allocation4], 1
    %s2849 = scalar_lea.sflag [#allocation4], 1
    %2850 = vsyncpa %s2849, 1

</llo_original>
